<compile_context>
chip_gen: v6e
topology: v6e:2x2x1
jax: 0.10.0
libtpu: 0.0.40
codegen_flags: <defaults>
</compile_context>

<pallas_src>
import functools
from typing import NamedTuple

import jax
import jax.numpy as jnp
import numpy as np
from jax.experimental import pallas as pl
from jax.experimental.pallas import tpu as pltpu


# ----------------------------------------------------------------------------
# Host-side constant helpers (masks / selection matrices, built once in numpy)
# ----------------------------------------------------------------------------
def _make_colmask(h, w):
    """(3, H*W) masks for kw=0,1,2: zero out columns that wrap across rows."""
    s = h * w
    j = np.arange(s) % w
    cm = np.ones((3, s), np.float32)
    cm[0, j == 0] = 0.0          # kw=0 reads j-1 -> invalid at j==0
    cm[2, j == w - 1] = 0.0      # kw=2 reads j+1 -> invalid at j==W-1
    return jnp.asarray(cm)


def _make_pool_sel(h, w):
    """(H*W, Ho*Wo) 0/1 matrix selecting the top-left corner of each 2x2 window."""
    s = h * w
    ho, wo = h // 2, w // 2
    so = ho * wo
    sel = np.zeros((s, so), np.float32)
    oo = np.arange(so)
    corners = (2 * (oo // wo)) * w + 2 * (oo % wo)
    sel[corners, oo] = 1.0
    return jnp.asarray(sel)


class _ConvCfg(NamedTuple):
    cin: int
    cout: int
    h: int
    w: int
    pool: bool


# ----------------------------------------------------------------------------
# Kernels
# ----------------------------------------------------------------------------
def _shift_flat(x, d):
    """result[:, s] = x[:, s + d] with zero fill out of range (static d)."""
    c, s = x.shape
    if d == 0:
        return x
    if d > 0:
        return jnp.concatenate([x[:, d:], jnp.zeros((c, d), x.dtype)], axis=1)
    return jnp.concatenate([jnp.zeros((c, -d), x.dtype), x[:, : s + d]], axis=1)


def feature_kernel(*refs, cfgs):
    """Fused [(conv3x3->ReLU)*P -> maxpool2]* stack for one sample.

    Activations stay channel-major with the flattened spatial dim (H*W) on the
    lane axis; each conv is a single im2col matmul (Cout,9Cin)@(9Cin,H*W); the
    2x2 max-pool is two shifted max ops plus a corner-selection matmul.
    Everything between layers lives in VMEM.

    refs = [x_ref, (w_ref, b_ref, colmask_ref[, sel_ref])*num_layers, o_ref]
    """
    x_ref = refs[0]
    o_ref = refs[-1]
    a = x_ref[0]                                   # (Cin0, H0*W0) f32
    idx = 1
    for cfg in cfgs:
        w_ref, b_ref, cm_ref = refs[idx], refs[idx + 1], refs[idx + 2]
        idx += 3
        cm = cm_ref[...]                           # (3, S)
        taps = []
        for kh in range(3):
            for kw in range(3):
                d = (kh - 1) * cfg.w + (kw - 1)
                sh = _shift_flat(a, d)
                if kw != 1:                        # kill row-wrapped columns
                    sh = sh * cm[kw:kw + 1, :]
                taps.append(sh)
        p = jnp.concatenate(taps, axis=0)          # (9*Cin, S) im2col
        y = jnp.dot(w_ref[...], p, preferred_element_type=jnp.float32)
        y = jnp.maximum(y + b_ref[...], 0.0)       # (Cout, S), fused bias+ReLU
        if cfg.pool:
            sel_ref = refs[idx]
            idx += 1
            m1 = jnp.maximum(y, _shift_flat(y, 1))        # max over j, j+1
            m2 = jnp.maximum(m1, _shift_flat(m1, cfg.w))  # max over i, i+1
            y = jnp.dot(m2, sel_ref[...],                  # pick 2x2 corners
                        preferred_element_type=jnp.float32)  # (Cout, S//4)
        a = y
    o_ref[0] = a.astype(o_ref.dtype)


def classifier_kernel(*refs, n_layers):
    """Fused (Linear->ReLU)*M -> Linear over a batch tile; hidden acts in VMEM."""
    x_ref = refs[0]
    o_ref = refs[-1]
    h = x_ref[...]
    for j in range(n_layers):
        w_ref, b_ref = refs[1 + 2 * j], refs[2 + 2 * j]
        h = jnp.dot(h, w_ref[...], preferred_element_type=jnp.float32) + b_ref[...]
        if j < n_layers - 1:
            h = jnp.maximum(h, 0.0)
    o_ref[...] = h.astype(o_ref.dtype)


# ----------------------------------------------------------------------------
# Model
# ----------------------------------------------------------------------------
class ConvClassifierPallas:
    POOL_STRIDE = 2

    def __init__(self, in_size, out_classes, filters, pool_every, hidden_dims, key):
        self.in_size = in_size
        self.out_classes = out_classes
        self.filters = list(filters)
        self.pool_every = pool_every
        self.hidden_dims = list(hidden_dims)

        in_channels, h, w = in_size

        # ---- conv stack params + static per-layer config ----
        self.conv_params = []     # (w_oihw, b) for the pure-JAX reference
        self.conv_cfgs = []       # static shapes for the kernel
        self.conv_inputs = []     # flat array list fed to the feature kernel
        self.num_pool_layers = 0
        chans = [in_channels] + self.filters
        for i, (cin, cout) in enumerate(zip(chans[:-1], chans[1:])):
            key, kw_, kb_ = jax.random.split(key, 3)
            fan_in = cin * 9
            w_oihw = jax.random.normal(kw_, (cout, cin, 3, 3), jnp.float32) / np.sqrt(fan_in)
            b = jax.random.normal(kb_, (cout,), jnp.float32) * 0.01
            self.conv_params.append((w_oihw, b))

            pool = (i + 1) % pool_every == 0
            self.conv_cfgs.append(_ConvCfg(cin=cin, cout=cout, h=h, w=w, pool=pool))

            # im2col weight: row order (kh, kw, cin) matches the kernel's tap order
            w_mat = jnp.transpose(w_oihw, (0, 2, 3, 1)).reshape(cout, 9 * cin)
            self.conv_inputs.extend([w_mat, b.reshape(cout, 1), _make_colmask(h, w)])
            if pool:
                self.conv_inputs.append(_make_pool_sel(h, w))
                self.num_pool_layers += 1
                h, w = h // 2, w // 2

        self.feat_c, self.feat_h, self.feat_w = self.filters[-1], h, w
        self.feat_s = h * w

        # ---- classifier params ----
        first_in = self.feat_c * self.feat_s   # == filters[-1]*(H//ds)*(W//ds)
        dims = [first_in] + self.hidden_dims + [out_classes]
        self.fc_params = []
        for din, dout in zip(dims[:-1], dims[1:]):
            key, kw_, kb_ = jax.random.split(key, 3)
            wfc = jax.random.normal(kw_, (din, dout), jnp.float32) / np.sqrt(din)
            bfc = jax.random.normal(kb_, (1, dout), jnp.float32) * 0.01
            self.fc_params.append((wfc, bfc))

        self._forward = jax.jit(self._forward_impl)

    # ------------------------------------------------------------------
    def _forward_impl(self, x_nchw):
        B, C, H, W = x_nchw.shape
        s0 = H * W
        x2 = x_nchw.reshape(B, C, s0)          # free (contiguous) reshape

        # -------- fused feature extractor: one pallas_call, grid over batch ----
        in_specs = [pl.BlockSpec((1, C, s0), lambda n: (n, 0, 0))]
        for arr in self.conv_inputs:           # all 2D constants: whole-array blocks
            in_specs.append(pl.BlockSpec(arr.shape, lambda n: (0, 0)))

        feats = pl.pallas_call(
            functools.partial(feature_kernel, cfgs=tuple(self.conv_cfgs)),
            out_shape=jax.ShapeDtypeStruct((B, self.feat_c, self.feat_s), jnp.float32),
            grid=(B,),
            in_specs=in_specs,
            out_specs=pl.BlockSpec((1, self.feat_c, self.feat_s),
                                   lambda n: (n, 0, 0)),
            compiler_params=pltpu.CompilerParams(
                dimension_semantics=("parallel",)),
        )(x2, *self.conv_inputs)

        # (C, H*W) layout flattens in exactly the PyTorch (C,H,W) order: free reshape
        flat = feats.reshape(B, self.feat_c * self.feat_s)

        # -------- fused classifier: one pallas_call over batch tiles ----------
        din = flat.shape[1]
        bt = B if B <= 128 else 128
        fc_inputs = []
        fc_specs = [pl.BlockSpec((bt, din), lambda n: (n, 0))]
        for wfc, bfc in self.fc_params:
            fc_inputs.extend([wfc, bfc])
            fc_specs.append(pl.BlockSpec(wfc.shape, lambda n: (0, 0)))
            fc_specs.append(pl.BlockSpec(bfc.shape, lambda n: (0, 0)))

        out = pl.pallas_call(
            functools.partial(classifier_kernel, n_layers=len(self.fc_params)),
            out_shape=jax.ShapeDtypeStruct((B, self.out_classes), jnp.float32),
            grid=(pl.cdiv(B, bt),),
            in_specs=fc_specs,
            out_specs=pl.BlockSpec((bt, self.out_classes), lambda n: (n, 0)),
            compiler_params=pltpu.CompilerParams(
                dimension_semantics=("parallel",)),
        )(flat, *fc_inputs)
        return out

    def __call__(self, x_nchw):
        return self._forward(x_nchw)


# ----------------------------------------------------------------------------
# Pure-JAX reference (for correctness check)
# ----------------------------------------------------------------------------
def reference_forward(model, x_nchw):
    x = x_nchw
    for i, (w, b) in enumerate(model.conv_params):
        x = jax.lax.conv_general_dilated(
            x, w, window_strides=(1, 1), padding="SAME",
            dimension_numbers=("NCHW", "OIHW", "NCHW"),
        ) + b.reshape(1, -1, 1, 1)
        x = jnp.maximum(x, 0.0)
        if (i + 1) % model.pool_every == 0:
            x = jax.lax.reduce_window(
                x, -jnp.inf, jax.lax.max,
                window_dimensions=(1, 1, 2, 2), window_strides=(1, 1, 2, 2),
                padding="VALID",
            )
    x = x.reshape(x.shape[0], -1)
    n_fc = len(model.fc_params)
    for j, (w, b) in enumerate(model.fc_params):
        x = x @ w + b
        if j < n_fc - 1:
            x = jnp.maximum(x, 0.0)
    return x


# ----------------------------------------------------------------------------
if __name__ == "__main__":
    key = jax.random.PRNGKey(0)
    k_x, k_p = jax.random.split(key)

    # (C,H,W)=(4,16,16), filters=[8,8], pool_every=2 (-> one 2x2 pool),
    # hidden_dims=[32], 10 classes, batch=2.
    in_size = (4, 16, 16)
    model = ConvClassifierPallas(
        in_size=in_size, out_classes=10, filters=[8, 8],
        pool_every=2, hidden_dims=[32], key=k_p,
    )

    x = jax.random.normal(k_x, (2,) + in_size, dtype=jnp.float32)  # NCHW

    out = jax.block_until_ready(model(x))
    ref = jax.block_until_ready(reference_forward(model, x))

    assert out.shape == (2, 10), out.shape
    if not np.allclose(np.asarray(out), np.asarray(ref), rtol=1e-2, atol=1e-2):
        raise AssertionError(
            "mismatch vs reference, max abs diff = "
            f"{np.max(np.abs(np.asarray(out) - np.asarray(ref)))}"
        )
    print("KERNEL_OK")
</pallas_src>

<mosaic_0001>
module attributes {stable_mosaic.version = 11 : i64} {
  func.func @classifier_kernel(%arg0: i32, %arg1: memref<2x512xf32, #tpu.memory_space<vmem>>, %arg2: memref<512x32xf32, #tpu.memory_space<vmem>>, %arg3: memref<1x32xf32, #tpu.memory_space<vmem>>, %arg4: memref<32x10xf32, #tpu.memory_space<vmem>>, %arg5: memref<1x10xf32, #tpu.memory_space<vmem>>, %arg6: memref<2x10xf32, #tpu.memory_space<vmem>>) attributes {dimension_semantics = [#tpu.dimension_semantics<parallel>], iteration_bounds = array<i64: 1>, scalar_prefetch = 0 : i64, scratch_operands = 0 : i64, tpu.core_type = #tpu.core_type<tc>, window_params = [{transform_indices = @transform_0, window_bounds = array<i64: 2, 512>}, {pipeline_mode = #tpu.pipeline_mode<synchronous>, transform_indices = @transform_1, window_bounds = array<i64: 512, 32>}, {pipeline_mode = #tpu.pipeline_mode<synchronous>, transform_indices = @transform_2, window_bounds = array<i64: 1, 32>}, {pipeline_mode = #tpu.pipeline_mode<synchronous>, transform_indices = @transform_3, window_bounds = array<i64: 32, 10>}, {pipeline_mode = #tpu.pipeline_mode<synchronous>, transform_indices = @transform_4, window_bounds = array<i64: 1, 10>}, {transform_indices = @transform_5, window_bounds = array<i64: 2, 10>}]} {
    %c0 = arith.constant 0 : index
    %c0_0 = arith.constant 0 : index
    %0 = vector.load %arg1[%c0, %c0_0] : memref<2x512xf32, #tpu.memory_space<vmem>>, vector<2x512xf32>
    %c0_1 = arith.constant 0 : index
    %c0_2 = arith.constant 0 : index
    %1 = vector.load %arg2[%c0_1, %c0_2] : memref<512x32xf32, #tpu.memory_space<vmem>>, vector<512x32xf32>
    %cst = arith.constant dense<0.000000e+00> : vector<2x32xf32>
    %2 = tpu.matmul %0, %1, %cst {dimension_numbers = #tpu.dot_dimension_numbers<[1], [0], [0], [1], [0, 0, 1, 1], [], []>} : vector<2x512xf32>, vector<512x32xf32>, vector<2x32xf32> -> vector<2x32xf32>
    %c0_3 = arith.constant 0 : index
    %c0_4 = arith.constant 0 : index
    %3 = vector.load %arg3[%c0_3, %c0_4] : memref<1x32xf32, #tpu.memory_space<vmem>>, vector<1x32xf32>
    %4 = vector.broadcast %3 : vector<1x32xf32> to vector<2x32xf32>
    %5 = arith.addf %2, %4 : vector<2x32xf32>
    %cst_5 = arith.constant 0.000000e+00 : f32
    %6 = vector.broadcast %cst_5 : f32 to vector<2x32xf32>
    %7 = arith.maximumf %5, %6 : vector<2x32xf32>
    %c0_6 = arith.constant 0 : index
    %c0_7 = arith.constant 0 : index
    %8 = vector.load %arg4[%c0_6, %c0_7] : memref<32x10xf32, #tpu.memory_space<vmem>>, vector<32x10xf32>
    %cst_8 = arith.constant dense<0.000000e+00> : vector<2x10xf32>
    %9 = tpu.matmul %7, %8, %cst_8 {dimension_numbers = #tpu.dot_dimension_numbers<[1], [0], [0], [1], [0, 0, 1, 1], [], []>} : vector<2x32xf32>, vector<32x10xf32>, vector<2x10xf32> -> vector<2x10xf32>
    %c0_9 = arith.constant 0 : index
    %c0_10 = arith.constant 0 : index
    %10 = vector.load %arg5[%c0_9, %c0_10] : memref<1x10xf32, #tpu.memory_space<vmem>>, vector<1x10xf32>
    %11 = vector.broadcast %10 : vector<1x10xf32> to vector<2x10xf32>
    %12 = arith.addf %9, %11 : vector<2x10xf32>
    %c0_11 = arith.constant 0 : index
    %c0_12 = arith.constant 0 : index
    %13 = vector.load %arg6[%c0_11, %c0_12] : memref<2x10xf32, #tpu.memory_space<vmem>>, vector<2x10xf32>
    tpu.vector_store %arg6[%c0_11, %c0_12], %12 {strides = array<i32>} : memref<2x10xf32, #tpu.memory_space<vmem>>, vector<2x10xf32>,
    return
  }
  func.func @transform_0(%arg0: i32) -> (i32, i32) {
    %c0_i32 = arith.constant 0 : i32
    %c0_i32_0 = arith.constant 0 : i32
    return %arg0, %c0_i32 : i32, i32
  }
  func.func @transform_1(%arg0: i32) -> (i32, i32) {
    %c0_i32 = arith.constant 0 : i32
    %c0_i32_0 = arith.constant 0 : i32
    %c0_i32_1 = arith.constant 0 : i32
    return %c0_i32, %c0_i32_0 : i32, i32
  }
  func.func @transform_2(%arg0: i32) -> (i32, i32) {
    %c0_i32 = arith.constant 0 : i32
    %c0_i32_0 = arith.constant 0 : i32
    %c0_i32_1 = arith.constant 0 : i32
    return %c0_i32, %c0_i32_0 : i32, i32
  }
  func.func @transform_3(%arg0: i32) -> (i32, i32) {
    %c0_i32 = arith.constant 0 : i32
    %c0_i32_0 = arith.constant 0 : i32
    %c0_i32_1 = arith.constant 0 : i32
    return %c0_i32, %c0_i32_0 : i32, i32
  }
  func.func @transform_4(%arg0: i32) -> (i32, i32) {
    %c0_i32 = arith.constant 0 : i32
    %c0_i32_0 = arith.constant 0 : i32
    %c0_i32_1 = arith.constant 0 : i32
    return %c0_i32, %c0_i32_0 : i32, i32
  }
  func.func @transform_5(%arg0: i32) -> (i32, i32) {
    %c0_i32 = arith.constant 0 : i32
    %c0_i32_0 = arith.constant 0 : i32
    return %arg0, %c0_i32 : i32, i32
  }
}

module attributes {stable_mosaic.version = 11 : i64} {
  func.func @feature_kernel(%arg0: i32, %arg1: memref<1x4x256xf32, #tpu.memory_space<vmem>>, %arg2: memref<8x36xf32, #tpu.memory_space<vmem>>, %arg3: memref<8x1xf32, #tpu.memory_space<vmem>>, %arg4: memref<3x256xf32, #tpu.memory_space<vmem>>, %arg5: memref<8x72xf32, #tpu.memory_space<vmem>>, %arg6: memref<8x1xf32, #tpu.memory_space<vmem>>, %arg7: memref<3x256xf32, #tpu.memory_space<vmem>>, %arg8: memref<256x64xf32, #tpu.memory_space<vmem>>, %arg9: memref<1x8x64xf32, #tpu.memory_space<vmem>>) attributes {dimension_semantics = [#tpu.dimension_semantics<parallel>], iteration_bounds = array<i64: 2>, scalar_prefetch = 0 : i64, scratch_operands = 0 : i64, tpu.core_type = #tpu.core_type<tc>, window_params = [{transform_indices = @transform_0, window_bounds = array<i64: 1, 4, 256>}, {pipeline_mode = #tpu.pipeline_mode<synchronous>, transform_indices = @transform_1, window_bounds = array<i64: 8, 36>}, {pipeline_mode = #tpu.pipeline_mode<synchronous>, transform_indices = @transform_2, window_bounds = array<i64: 8, 1>}, {pipeline_mode = #tpu.pipeline_mode<synchronous>, transform_indices = @transform_3, window_bounds = array<i64: 3, 256>}, {pipeline_mode = #tpu.pipeline_mode<synchronous>, transform_indices = @transform_4, window_bounds = array<i64: 8, 72>}, {pipeline_mode = #tpu.pipeline_mode<synchronous>, transform_indices = @transform_5, window_bounds = array<i64: 8, 1>}, {pipeline_mode = #tpu.pipeline_mode<synchronous>, transform_indices = @transform_6, window_bounds = array<i64: 3, 256>}, {pipeline_mode = #tpu.pipeline_mode<synchronous>, transform_indices = @transform_7, window_bounds = array<i64: 256, 64>}, {transform_indices = @transform_8, window_bounds = array<i64: 1, 8, 64>}]} {
    %c0 = arith.constant 0 : index
    %c0_0 = arith.constant 0 : index
    %c0_1 = arith.constant 0 : index
    %0 = vector.load %arg1[%c0, %c0_0, %c0_1] : memref<1x4x256xf32, #tpu.memory_space<vmem>>, vector<1x4x256xf32>
    %1 = vector.shape_cast %0 : vector<1x4x256xf32> to vector<4x256xf32>
    %c0_2 = arith.constant 0 : index
    %c0_3 = arith.constant 0 : index
    %2 = vector.load %arg4[%c0_2, %c0_3] : memref<3x256xf32, #tpu.memory_space<vmem>>, vector<3x256xf32>
    %cst = arith.constant 0.000000e+00 : f32
    %3 = vector.broadcast %cst : f32 to vector<4x17xf32>
    %4 = vector.extract_strided_slice %1 {offsets = [0, 0], sizes = [4, 239], strides = [1, 1]} : vector<4x256xf32> to vector<4x239xf32>
    %5 = tpu.concatenate %3, %4 in 1 : vector<4x17xf32>, vector<4x239xf32> -> vector<4x256xf32>
    %6 = vector.extract_strided_slice %2 {offsets = [0, 0], sizes = [1, 256], strides = [1, 1]} : vector<3x256xf32> to vector<1x256xf32>
    %7 = vector.broadcast %6 : vector<1x256xf32> to vector<4x256xf32>
    %8 = arith.mulf %5, %7 : vector<4x256xf32>
    %cst_4 = arith.constant 0.000000e+00 : f32
    %9 = vector.broadcast %cst_4 : f32 to vector<4x16xf32>
    %10 = vector.extract_strided_slice %1 {offsets = [0, 0], sizes = [4, 240], strides = [1, 1]} : vector<4x256xf32> to vector<4x240xf32>
    %11 = tpu.concatenate %9, %10 in 1 : vector<4x16xf32>, vector<4x240xf32> -> vector<4x256xf32>
    %cst_5 = arith.constant 0.000000e+00 : f32
    %12 = vector.broadcast %cst_5 : f32 to vector<4x15xf32>
    %13 = vector.extract_strided_slice %1 {offsets = [0, 0], sizes = [4, 241], strides = [1, 1]} : vector<4x256xf32> to vector<4x241xf32>
    %14 = tpu.concatenate %12, %13 in 1 : vector<4x15xf32>, vector<4x241xf32> -> vector<4x256xf32>
    %15 = vector.extract_strided_slice %2 {offsets = [2, 0], sizes = [1, 256], strides = [1, 1]} : vector<3x256xf32> to vector<1x256xf32>
    %16 = vector.broadcast %15 : vector<1x256xf32> to vector<4x256xf32>
    %17 = arith.mulf %14, %16 : vector<4x256xf32>
    %cst_6 = arith.constant 0.000000e+00 : f32
    %18 = vector.broadcast %cst_6 : f32 to vector<4x1xf32>
    %19 = vector.extract_strided_slice %1 {offsets = [0, 0], sizes = [4, 255], strides = [1, 1]} : vector<4x256xf32> to vector<4x255xf32>
    %20 = tpu.concatenate %18, %19 in 1 : vector<4x1xf32>, vector<4x255xf32> -> vector<4x256xf32>
    %21 = vector.extract_strided_slice %2 {offsets = [0, 0], sizes = [1, 256], strides = [1, 1]} : vector<3x256xf32> to vector<1x256xf32>
    %22 = vector.broadcast %21 : vector<1x256xf32> to vector<4x256xf32>
    %23 = arith.mulf %20, %22 : vector<4x256xf32>
    %24 = vector.extract_strided_slice %1 {offsets = [0, 1], sizes = [4, 255], strides = [1, 1]} : vector<4x256xf32> to vector<4x255xf32>
    %cst_7 = arith.constant 0.000000e+00 : f32
    %25 = vector.broadcast %cst_7 : f32 to vector<4x1xf32>
    %26 = tpu.concatenate %24, %25 in 1 : vector<4x255xf32>, vector<4x1xf32> -> vector<4x256xf32>
    %27 = vector.extract_strided_slice %2 {offsets = [2, 0], sizes = [1, 256], strides = [1, 1]} : vector<3x256xf32> to vector<1x256xf32>
    %28 = vector.broadcast %27 : vector<1x256xf32> to vector<4x256xf32>
    %29 = arith.mulf %26, %28 : vector<4x256xf32>
    %30 = vector.extract_strided_slice %1 {offsets = [0, 15], sizes = [4, 241], strides = [1, 1]} : vector<4x256xf32> to vector<4x241xf32>
    %cst_8 = arith.constant 0.000000e+00 : f32
    %31 = vector.broadcast %cst_8 : f32 to vector<4x15xf32>
    %32 = tpu.concatenate %30, %31 in 1 : vector<4x241xf32>, vector<4x15xf32> -> vector<4x256xf32>
    %33 = vector.extract_strided_slice %2 {offsets = [0, 0], sizes = [1, 256], strides = [1, 1]} : vector<3x256xf32> to vector<1x256xf32>
    %34 = vector.broadcast %33 : vector<1x256xf32> to vector<4x256xf32>
    %35 = arith.mulf %32, %34 : vector<4x256xf32>
    %36 = vector.extract_strided_slice %1 {offsets = [0, 16], sizes = [4, 240], strides = [1, 1]} : vector<4x256xf32> to vector<4x240xf32>
    %cst_9 = arith.constant 0.000000e+00 : f32
    %37 = vector.broadcast %cst_9 : f32 to vector<4x16xf32>
    %38 = tpu.concatenate %36, %37 in 1 : vector<4x240xf32>, vector<4x16xf32> -> vector<4x256xf32>
    %39 = vector.extract_strided_slice %1 {offsets = [0, 17], sizes = [4, 239], strides = [1, 1]} : vector<4x256xf32> to vector<4x239xf32>
    %cst_10 = arith.constant 0.000000e+00 : f32
    %40 = vector.broadcast %cst_10 : f32 to vector<4x17xf32>
    %41 = tpu.concatenate %39, %40 in 1 : vector<4x239xf32>, vector<4x17xf32> -> vector<4x256xf32>
    %42 = vector.extract_strided_slice %2 {offsets = [2, 0], sizes = [1, 256], strides = [1, 1]} : vector<3x256xf32> to vector<1x256xf32>
    %43 = vector.broadcast %42 : vector<1x256xf32> to vector<4x256xf32>
    %44 = arith.mulf %41, %43 : vector<4x256xf32>
    %45 = tpu.concatenate %8, %11, %17, %23, %1, %29, %35, %38, %44 in 0 : vector<4x256xf32>, vector<4x256xf32>, vector<4x256xf32>, vector<4x256xf32>, vector<4x256xf32>, vector<4x256xf32>, vector<4x256xf32>, vector<4x256xf32>, vector<4x256xf32> -> vector<36x256xf32>
    %c0_11 = arith.constant 0 : index
    %c0_12 = arith.constant 0 : index
    %46 = vector.load %arg2[%c0_11, %c0_12] : memref<8x36xf32, #tpu.memory_space<vmem>>, vector<8x36xf32>
    %cst_13 = arith.constant dense<0.000000e+00> : vector<8x256xf32>
    %47 = tpu.matmul %46, %45, %cst_13 {dimension_numbers = #tpu.dot_dimension_numbers<[1], [0], [0], [1], [0, 0, 1, 1], [], []>} : vector<8x36xf32>, vector<36x256xf32>, vector<8x256xf32> -> vector<8x256xf32>
    %c0_14 = arith.constant 0 : index
    %c0_15 = arith.constant 0 : index
    %48 = vector.load %arg3[%c0_14, %c0_15] : memref<8x1xf32, #tpu.memory_space<vmem>>, vector<8x1xf32>
    %49 = vector.broadcast %48 : vector<8x1xf32> to vector<8x256xf32>
    %50 = arith.addf %47, %49 : vector<8x256xf32>
    %cst_16 = arith.constant 0.000000e+00 : f32
    %51 = vector.broadcast %cst_16 : f32 to vector<8x256xf32>
    %52 = arith.maximumf %50, %51 : vector<8x256xf32>
    %c0_17 = arith.constant 0 : index
    %c0_18 = arith.constant 0 : index
    %53 = vector.load %arg7[%c0_17, %c0_18] : memref<3x256xf32, #tpu.memory_space<vmem>>, vector<3x256xf32>
    %cst_19 = arith.constant 0.000000e+00 : f32
    %54 = vector.broadcast %cst_19 : f32 to vector<8x17xf32>
    %55 = vector.extract_strided_slice %52 {offsets = [0, 0], sizes = [8, 239], strides = [1, 1]} : vector<8x256xf32> to vector<8x239xf32>
    %56 = tpu.concatenate %54, %55 in 1 : vector<8x17xf32>, vector<8x239xf32> -> vector<8x256xf32>
    %57 = vector.extract_strided_slice %53 {offsets = [0, 0], sizes = [1, 256], strides = [1, 1]} : vector<3x256xf32> to vector<1x256xf32>
    %58 = vector.broadcast %57 : vector<1x256xf32> to vector<8x256xf32>
    %59 = arith.mulf %56, %58 : vector<8x256xf32>
    %cst_20 = arith.constant 0.000000e+00 : f32
    %60 = vector.broadcast %cst_20 : f32 to vector<8x16xf32>
    %61 = vector.extract_strided_slice %52 {offsets = [0, 0], sizes = [8, 240], strides = [1, 1]} : vector<8x256xf32> to vector<8x240xf32>
    %62 = tpu.concatenate %60, %61 in 1 : vector<8x16xf32>, vector<8x240xf32> -> vector<8x256xf32>
    %cst_21 = arith.constant 0.000000e+00 : f32
    %63 = vector.broadcast %cst_21 : f32 to vector<8x15xf32>
    %64 = vector.extract_strided_slice %52 {offsets = [0, 0], sizes = [8, 241], strides = [1, 1]} : vector<8x256xf32> to vector<8x241xf32>
    %65 = tpu.concatenate %63, %64 in 1 : vector<8x15xf32>, vector<8x241xf32> -> vector<8x256xf32>
    %66 = vector.extract_strided_slice %53 {offsets = [2, 0], sizes = [1, 256], strides = [1, 1]} : vector<3x256xf32> to vector<1x256xf32>
    %67 = vector.broadcast %66 : vector<1x256xf32> to vector<8x256xf32>
    %68 = arith.mulf %65, %67 : vector<8x256xf32>
    %cst_22 = arith.constant 0.000000e+00 : f32
    %69 = vector.broadcast %cst_22 : f32 to vector<8x1xf32>
    %70 = vector.extract_strided_slice %52 {offsets = [0, 0], sizes = [8, 255], strides = [1, 1]} : vector<8x256xf32> to vector<8x255xf32>
    %71 = tpu.concatenate %69, %70 in 1 : vector<8x1xf32>, vector<8x255xf32> -> vector<8x256xf32>
    %72 = vector.extract_strided_slice %53 {offsets = [0, 0], sizes = [1, 256], strides = [1, 1]} : vector<3x256xf32> to vector<1x256xf32>
    %73 = vector.broadcast %72 : vector<1x256xf32> to vector<8x256xf32>
    %74 = arith.mulf %71, %73 : vector<8x256xf32>
    %75 = vector.extract_strided_slice %52 {offsets = [0, 1], sizes = [8, 255], strides = [1, 1]} : vector<8x256xf32> to vector<8x255xf32>
    %cst_23 = arith.constant 0.000000e+00 : f32
    %76 = vector.broadcast %cst_23 : f32 to vector<8x1xf32>
    %77 = tpu.concatenate %75, %76 in 1 : vector<8x255xf32>, vector<8x1xf32> -> vector<8x256xf32>
    %78 = vector.extract_strided_slice %53 {offsets = [2, 0], sizes = [1, 256], strides = [1, 1]} : vector<3x256xf32> to vector<1x256xf32>
    %79 = vector.broadcast %78 : vector<1x256xf32> to vector<8x256xf32>
    %80 = arith.mulf %77, %79 : vector<8x256xf32>
    %81 = vector.extract_strided_slice %52 {offsets = [0, 15], sizes = [8, 241], strides = [1, 1]} : vector<8x256xf32> to vector<8x241xf32>
    %cst_24 = arith.constant 0.000000e+00 : f32
    %82 = vector.broadcast %cst_24 : f32 to vector<8x15xf32>
    %83 = tpu.concatenate %81, %82 in 1 : vector<8x241xf32>, vector<8x15xf32> -> vector<8x256xf32>
    %84 = vector.extract_strided_slice %53 {offsets = [0, 0], sizes = [1, 256], strides = [1, 1]} : vector<3x256xf32> to vector<1x256xf32>
    %85 = vector.broadcast %84 : vector<1x256xf32> to vector<8x256xf32>
    %86 = arith.mulf %83, %85 : vector<8x256xf32>
    %87 = vector.extract_strided_slice %52 {offsets = [0, 16], sizes = [8, 240], strides = [1, 1]} : vector<8x256xf32> to vector<8x240xf32>
    %cst_25 = arith.constant 0.000000e+00 : f32
    %88 = vector.broadcast %cst_25 : f32 to vector<8x16xf32>
    %89 = tpu.concatenate %87, %88 in 1 : vector<8x240xf32>, vector<8x16xf32> -> vector<8x256xf32>
    %90 = vector.extract_strided_slice %52 {offsets = [0, 17], sizes = [8, 239], strides = [1, 1]} : vector<8x256xf32> to vector<8x239xf32>
    %cst_26 = arith.constant 0.000000e+00 : f32
    %91 = vector.broadcast %cst_26 : f32 to vector<8x17xf32>
    %92 = tpu.concatenate %90, %91 in 1 : vector<8x239xf32>, vector<8x17xf32> -> vector<8x256xf32>
    %93 = vector.extract_strided_slice %53 {offsets = [2, 0], sizes = [1, 256], strides = [1, 1]} : vector<3x256xf32> to vector<1x256xf32>
    %94 = vector.broadcast %93 : vector<1x256xf32> to vector<8x256xf32>
    %95 = arith.mulf %92, %94 : vector<8x256xf32>
    %96 = tpu.concatenate %59, %62, %68, %74, %52, %80, %86, %89, %95 in 0 : vector<8x256xf32>, vector<8x256xf32>, vector<8x256xf32>, vector<8x256xf32>, vector<8x256xf32>, vector<8x256xf32>, vector<8x256xf32>, vector<8x256xf32>, vector<8x256xf32> -> vector<72x256xf32>
    %c0_27 = arith.constant 0 : index
    %c0_28 = arith.constant 0 : index
    %97 = vector.load %arg5[%c0_27, %c0_28] : memref<8x72xf32, #tpu.memory_space<vmem>>, vector<8x72xf32>
    %cst_29 = arith.constant dense<0.000000e+00> : vector<8x256xf32>
    %98 = tpu.matmul %97, %96, %cst_29 {dimension_numbers = #tpu.dot_dimension_numbers<[1], [0], [0], [1], [0, 0, 1, 1], [], []>} : vector<8x72xf32>, vector<72x256xf32>, vector<8x256xf32> -> vector<8x256xf32>
    %c0_30 = arith.constant 0 : index
    %c0_31 = arith.constant 0 : index
    %99 = vector.load %arg6[%c0_30, %c0_31] : memref<8x1xf32, #tpu.memory_space<vmem>>, vector<8x1xf32>
    %100 = vector.broadcast %99 : vector<8x1xf32> to vector<8x256xf32>
    %101 = arith.addf %98, %100 : vector<8x256xf32>
    %cst_32 = arith.constant 0.000000e+00 : f32
    %102 = vector.broadcast %cst_32 : f32 to vector<8x256xf32>
    %103 = arith.maximumf %101, %102 : vector<8x256xf32>
    %104 = vector.extract_strided_slice %103 {offsets = [0, 1], sizes = [8, 255], strides = [1, 1]} : vector<8x256xf32> to vector<8x255xf32>
    %cst_33 = arith.constant 0.000000e+00 : f32
    %105 = vector.broadcast %cst_33 : f32 to vector<8x1xf32>
    %106 = tpu.concatenate %104, %105 in 1 : vector<8x255xf32>, vector<8x1xf32> -> vector<8x256xf32>
    %107 = arith.maximumf %103, %106 : vector<8x256xf32>
    %108 = vector.extract_strided_slice %107 {offsets = [0, 16], sizes = [8, 240], strides = [1, 1]} : vector<8x256xf32> to vector<8x240xf32>
    %cst_34 = arith.constant 0.000000e+00 : f32
    %109 = vector.broadcast %cst_34 : f32 to vector<8x16xf32>
    %110 = tpu.concatenate %108, %109 in 1 : vector<8x240xf32>, vector<8x16xf32> -> vector<8x256xf32>
    %111 = arith.maximumf %107, %110 : vector<8x256xf32>
    %c0_35 = arith.constant 0 : index
    %c0_36 = arith.constant 0 : index
    %112 = vector.load %arg8[%c0_35, %c0_36] : memref<256x64xf32, #tpu.memory_space<vmem>>, vector<256x64xf32>
    %cst_37 = arith.constant dense<0.000000e+00> : vector<8x64xf32>
    %113 = tpu.matmul %111, %112, %cst_37 {dimension_numbers = #tpu.dot_dimension_numbers<[1], [0], [0], [1], [0, 0, 1, 1], [], []>} : vector<8x256xf32>, vector<256x64xf32>, vector<8x64xf32> -> vector<8x64xf32>
    %c0_38 = arith.constant 0 : index
    %c0_39 = arith.constant 0 : index
    %c0_40 = arith.constant 0 : index
    %114 = vector.load %arg9[%c0_38, %c0_39, %c0_40] : memref<1x8x64xf32, #tpu.memory_space<vmem>>, vector<1x8x64xf32>
    %115 = vector.shape_cast %114 : vector<1x8x64xf32> to vector<8x64xf32>
    %116 = vector.shape_cast %113 : vector<8x64xf32> to vector<1x8x64xf32>
    tpu.vector_store %arg9[%c0_38, %c0_39, %c0_40], %116 {strides = array<i32>} : memref<1x8x64xf32, #tpu.memory_space<vmem>>, vector<1x8x64xf32>,
    return
  }
  func.func @transform_0(%arg0: i32) -> (i32, i32, i32) {
    %c0_i32 = arith.constant 0 : i32
    %c0_i32_0 = arith.constant 0 : i32
    %c0_i32_1 = arith.constant 0 : i32
    return %arg0, %c0_i32, %c0_i32_0 : i32, i32, i32
  }
  func.func @transform_1(%arg0: i32) -> (i32, i32) {
    %c0_i32 = arith.constant 0 : i32
    %c0_i32_0 = arith.constant 0 : i32
    %c0_i32_1 = arith.constant 0 : i32
    return %c0_i32, %c0_i32_0 : i32, i32
  }
  func.func @transform_2(%arg0: i32) -> (i32, i32) {
    %c0_i32 = arith.constant 0 : i32
    %c0_i32_0 = arith.constant 0 : i32
    %c0_i32_1 = arith.constant 0 : i32
    return %c0_i32, %c0_i32_0 : i32, i32
  }
  func.func @transform_3(%arg0: i32) -> (i32, i32) {
    %c0_i32 = arith.constant 0 : i32
    %c0_i32_0 = arith.constant 0 : i32
    %c0_i32_1 = arith.constant 0 : i32
    return %c0_i32, %c0_i32_0 : i32, i32
  }
  func.func @transform_4(%arg0: i32) -> (i32, i32) {
    %c0_i32 = arith.constant 0 : i32
    %c0_i32_0 = arith.constant 0 : i32
    %c0_i32_1 = arith.constant 0 : i32
    return %c0_i32, %c0_i32_0 : i32, i32
  }
  func.func @transform_5(%arg0: i32) -> (i32, i32) {
    %c0_i32 = arith.constant 0 : i32
    %c0_i32_0 = arith.constant 0 : i32
    %c0_i32_1 = arith.constant 0 : i32
    return %c0_i32, %c0_i32_0 : i32, i32
  }
  func.func @transform_6(%arg0: i32) -> (i32, i32) {
    %c0_i32 = arith.constant 0 : i32
    %c0_i32_0 = arith.constant 0 : i32
    %c0_i32_1 = arith.constant 0 : i32
    return %c0_i32, %c0_i32_0 : i32, i32
  }
  func.func @transform_7(%arg0: i32) -> (i32, i32) {
    %c0_i32 = arith.constant 0 : i32
    %c0_i32_0 = arith.constant 0 : i32
    %c0_i32_1 = arith.constant 0 : i32
    return %c0_i32, %c0_i32_0 : i32, i32
  }
  func.func @transform_8(%arg0: i32) -> (i32, i32, i32) {
    %c0_i32 = arith.constant 0 : i32
    %c0_i32_0 = arith.constant 0 : i32
    %c0_i32_1 = arith.constant 0 : i32
    return %arg0, %c0_i32, %c0_i32_0 : i32, i32, i32
  }
}

</mosaic_0001>

<llo_original>
// kernel: _forward_impl.3
$region0: #{_forward_impl.3}
  #allocation0 [shape = 'u32[]', space=smem, size = 0x4, offset = 0x4, fixed_abs, tag = 'smem constant byte address 0x4 - core index']
  #allocation1 [shape = 'u32[144,128]{1,0:T(1,128)}', space=vmem, size = 0x12000, scoped, tag = 'internal scratch']
  %s0 = inlined_call_operand.vmem [shape: f32[2,512], index: 0, kind: input, shape index: {}]
  %s1 = inlined_call_operand.hbm [shape: f32[512,32], index: 1, kind: input, shape index: {}]
  %s2 = inlined_call_operand.vmem [shape: f32[1,32], index: 2, kind: input, shape index: {}]
  %s3 = inlined_call_operand.vmem [shape: f32[32,10], index: 3, kind: input, shape index: {}]
  %s4 = inlined_call_operand.vmem [shape: f32[1,10], index: 4, kind: input, shape index: {}]
  %s5 = inlined_call_operand.hbm [shape: f32[2,10], index: 5, kind: output, shape index: {}]
  %s6 = sld [smem:[#allocation0]]
  $region34: #{_forward_impl.3} parent=0
    _
  %s8 = ssub.s32 1, %s6
  %s9 = scalar_select 0, %s8, %s6
  $region1: #{_forward_impl.3} parent=0
    #allocation2 [shape = 'u8[262144]{0}', space=vmem, size = 0x40000, scoped, tag = 'input window, operand 1, single buffered']
    #allocation3 [shape = 's32[1]{0}', space=sflag, size = 0x4, scoped, tag = 'scoped memory for _forward_impl.3']
    #allocation4 [shape = 's32[1]{0}', space=sflag, size = 0x4, scoped, tag = 'scoped memory for _forward_impl.3']
    #allocation5 [shape = 'u8[1024]{0}', space=vmem, size = 0x400, scoped, tag = 'output window, operand 0, single buffered']
    %10 = vsyncpa [#allocation3], 0
    %11 = vsyncpa [#allocation4], 0
    // Predicated region
    $region2: #{_forward_impl.3} parent=1 // pred_check
      _
    $region3: #{_forward_impl.3} parent=1 // pred_check_branch
      %13 = sbr.rel (0) target = $region5
    $region4: #{_forward_impl.3} parent=1 // pred_region
      _
    $region5: #{_forward_impl.3} parent=1 // pred_fallthru
      _
    // Predicated region
    $region6: #{_forward_impl.3} parent=1 // pred_check
      _
    $region7: #{_forward_impl.3} parent=1 // pred_check_branch
      %15 = sbr.rel (0) target = $region9
    $region8: #{_forward_impl.3} parent=1 // pred_region
      %s17 = ssub.s32 8192, 8192
      %18 = vsyncadd [#allocation3], %s17
      %s19 = sshll.u32 [#allocation2], 4
      %s20 = int_to_ptr.vmem [resolvable:$true] %s19
      %25 = dma.hbm_to_vmem [thread:$0]  %s1, 8192, %s20, [#allocation3], 128, 128, 8
    $region9: #{_forward_impl.3} parent=1 // pred_fallthru
      _
    // Predicated region
    $region10: #{_forward_impl.3} parent=1 // pred_check
      _
    $region11: #{_forward_impl.3} parent=1 // pred_check_branch
      %27 = sbr.rel (0) target = $region13
    $region12: #{_forward_impl.3} parent=1 // pred_region
      _
    $region13: #{_forward_impl.3} parent=1 // pred_fallthru
      _
    // Predicated region
    $region14: #{_forward_impl.3} parent=1 // pred_check
      _
    $region15: #{_forward_impl.3} parent=1 // pred_check_branch
      %29 = sbr.rel (0) target = $region17
    $region16: #{_forward_impl.3} parent=1 // pred_region
      _
    $region17: #{_forward_impl.3} parent=1 // pred_fallthru
      _
    // Predicated region
    $region18: #{_forward_impl.3} parent=1 // pred_check
      _
    $region19: #{_forward_impl.3} parent=1 // pred_check_branch
      %31 = sbr.rel (0) target = $region21
    $region20: #{_forward_impl.3} parent=1 // pred_region
      _
    $region21: #{_forward_impl.3} parent=1 // pred_fallthru
      _
    // Predicated region
    $region22: #{_forward_impl.3} parent=1 // pred_check
      _
    $region23: #{_forward_impl.3} parent=1 // pred_check_branch
      %33 = sbr.rel (0) target = $region25
    $region24: #{_forward_impl.3} parent=1 // pred_region
      %34 = dma.done [#allocation3], 8192
    $region25: #{_forward_impl.3} parent=1 // pred_fallthru
      _
    %v35 = vld [vmem:[%s0] sm:$0xff]
    %v36 = vld [vmem:[#allocation2] sm:$0xff]
    %v37 = vld [vmem:[#allocation2 + $0x8] sm:$0xff]
    %v38 = vld [vmem:[#allocation2 + $0x10] sm:$0xff]
    %v39 = vld [vmem:[#allocation2 + $0x18] sm:$0xff]
    %v40 = vld [vmem:[#allocation2 + $0x20] sm:$0xff]
    %v41 = vld [vmem:[#allocation2 + $0x28] sm:$0xff]
    %v42 = vld [vmem:[#allocation2 + $0x30] sm:$0xff]
    %v43 = vld [vmem:[#allocation2 + $0x38] sm:$0xff]
    %v44 = vld [vmem:[#allocation2 + $0x40] sm:$0xff]
    %v45 = vld [vmem:[#allocation2 + $0x48] sm:$0xff]
    %v46 = vld [vmem:[#allocation2 + $0x50] sm:$0xff]
    %v47 = vld [vmem:[#allocation2 + $0x58] sm:$0xff]
    %v48 = vld [vmem:[#allocation2 + $0x60] sm:$0xff]
    %v49 = vld [vmem:[#allocation2 + $0x68] sm:$0xff]
    %v50 = vld [vmem:[#allocation2 + $0x70] sm:$0xff]
    %v51 = vld [vmem:[#allocation2 + $0x78] sm:$0xff]
    %v52 = vld [vmem:[#allocation2 + $0x80] sm:$0xff]
    %v53 = vld [vmem:[#allocation2 + $0x88] sm:$0xff]
    %v54 = vld [vmem:[#allocation2 + $0x90] sm:$0xff]
    %v55 = vld [vmem:[#allocation2 + $0x98] sm:$0xff]
    %v56 = vld [vmem:[#allocation2 + $0xa0] sm:$0xff]
    %v57 = vld [vmem:[#allocation2 + $0xa8] sm:$0xff]
    %v58 = vld [vmem:[#allocation2 + $0xb0] sm:$0xff]
    %v59 = vld [vmem:[#allocation2 + $0xb8] sm:$0xff]
    %v60 = vld [vmem:[#allocation2 + $0xc0] sm:$0xff]
    %v61 = vld [vmem:[#allocation2 + $0xc8] sm:$0xff]
    %v62 = vld [vmem:[#allocation2 + $0xd0] sm:$0xff]
    %v63 = vld [vmem:[#allocation2 + $0xd8] sm:$0xff]
    %v64 = vld [vmem:[#allocation2 + $0xe0] sm:$0xff]
    %v65 = vld [vmem:[#allocation2 + $0xe8] sm:$0xff]
    %v66 = vld [vmem:[#allocation2 + $0xf0] sm:$0xff]
    %v67 = vld [vmem:[#allocation2 + $0xf8] sm:$0xff]
    %v68 = vld [vmem:[#allocation2 + $0x100] sm:$0xff]
    %v69 = vld [vmem:[#allocation2 + $0x108] sm:$0xff]
    %v70 = vld [vmem:[#allocation2 + $0x110] sm:$0xff]
    %v71 = vld [vmem:[#allocation2 + $0x118] sm:$0xff]
    %v72 = vld [vmem:[#allocation2 + $0x120] sm:$0xff]
    %v73 = vld [vmem:[#allocation2 + $0x128] sm:$0xff]
    %v74 = vld [vmem:[#allocation2 + $0x130] sm:$0xff]
    %v75 = vld [vmem:[#allocation2 + $0x138] sm:$0xff]
    %v76 = vld [vmem:[#allocation2 + $0x140] sm:$0xff]
    %v77 = vld [vmem:[#allocation2 + $0x148] sm:$0xff]
    %v78 = vld [vmem:[#allocation2 + $0x150] sm:$0xff]
    %v79 = vld [vmem:[#allocation2 + $0x158] sm:$0xff]
    %v80 = vld [vmem:[#allocation2 + $0x160] sm:$0xff]
    %v81 = vld [vmem:[#allocation2 + $0x168] sm:$0xff]
    %v82 = vld [vmem:[#allocation2 + $0x170] sm:$0xff]
    %v83 = vld [vmem:[#allocation2 + $0x178] sm:$0xff]
    %v84 = vld [vmem:[#allocation2 + $0x180] sm:$0xff]
    %v85 = vld [vmem:[#allocation2 + $0x188] sm:$0xff]
    %v86 = vld [vmem:[#allocation2 + $0x190] sm:$0xff]
    %v87 = vld [vmem:[#allocation2 + $0x198] sm:$0xff]
    %v88 = vld [vmem:[#allocation2 + $0x1a0] sm:$0xff]
    %v89 = vld [vmem:[#allocation2 + $0x1a8] sm:$0xff]
    %v90 = vld [vmem:[#allocation2 + $0x1b0] sm:$0xff]
    %v91 = vld [vmem:[#allocation2 + $0x1b8] sm:$0xff]
    %v92 = vld [vmem:[#allocation2 + $0x1c0] sm:$0xff]
    %v93 = vld [vmem:[#allocation2 + $0x1c8] sm:$0xff]
    %v94 = vld [vmem:[#allocation2 + $0x1d0] sm:$0xff]
    %v95 = vld [vmem:[#allocation2 + $0x1d8] sm:$0xff]
    %v96 = vld [vmem:[#allocation2 + $0x1e0] sm:$0xff]
    %v97 = vld [vmem:[#allocation2 + $0x1e8] sm:$0xff]
    %v98 = vld [vmem:[#allocation2 + $0x1f0] sm:$0xff]
    %v99 = vld [vmem:[#allocation2 + $0x1f8] sm:$0xff]
    %v100 = vld [vmem:[%s2] sm:$0x1]
    %v102 = vlaneseq
    %v103 = vshrl.u32 %v102, 7
    %v104 = vsub.s32 0, %v103
    %v105 = vrot.slane %v100, %v104
    %v108 = vcombine.high %v35, %v35
    %v110 = vunpack.c.l.s4 1983009808
    %v111 = vunpack.c.0.s8 %v110
    %v112 = vlaneseq
    %v113 = vshrl.u32 %v112, 7
    %v114 = vsub.s32 %v111, %v113
    %v115 = vrot.slane %v35, %v114
    %v117 = vunpack.c.l.s4 1983009808
    %v118 = vunpack.c.0.s8 %v117
    %v119 = vlaneseq
    %v120 = vshrl.u32 %v119, 7
    %v121 = vsub.s32 %v118, %v120
    %v122 = vrot.slane %v108, %v121
    %v123 = vcombine.high %v115, %v115
    %v124 = vcombine.high %v122, %v122
    %129 = vmatprep.subr.mxu0 0.0
    %130 = vmatpush1.msra.mxu0 %v51
    %131 = vmatprep.subr.mxu0 0.0
    %132 = vmatpush1.msra.mxu0 %v50
    %133 = vmatprep.subr.mxu0 0.0
    %134 = vmatpush1.msra.mxu0 %v49
    %135 = vmatprep.subr.mxu0 0.0
    %136 = vmatpush1.msra.mxu0 %v48
    %137 = vmatprep.subr.mxu0 0.0
    %138 = vmatpush1.msra.mxu0 %v47
    %139 = vmatprep.subr.mxu0 0.0
    %140 = vmatpush1.msra.mxu0 %v46
    %141 = vmatprep.subr.mxu0 0.0
    %142 = vmatpush1.msra.mxu0 %v45
    %143 = vmatprep.subr.mxu0 0.0
    %144 = vmatpush1.msra.mxu0 %v44
    %145 = vmatprep.subr.mxu0 0.0
    %146 = vmatpush1.msra.mxu0 %v43
    %147 = vmatprep.subr.mxu0 0.0
    %148 = vmatpush1.msra.mxu0 %v42
    %149 = vmatprep.subr.mxu0 0.0
    %150 = vmatpush1.msra.mxu0 %v41
    %151 = vmatprep.subr.mxu0 0.0
    %152 = vmatpush1.msra.mxu0 %v40
    %153 = vmatprep.subr.mxu0 0.0
    %154 = vmatpush1.msra.mxu0 %v39
    %155 = vmatprep.subr.mxu0 0.0
    %156 = vmatpush1.msra.mxu0 %v38
    %157 = vmatprep.subr.mxu0 0.0
    %158 = vmatpush1.msra.mxu0 %v37
    %159 = vmatprep.subr.mxu0 0.0
    %160 = vmatpush1.msra.mxu0 %v36
    %161 = vmatprep.subr.mxu0 0.0
    %162 = vmatpush2.msra.mxu0 %v67
    %163 = vmatprep.subr.mxu0 0.0
    %164 = vmatpush2.msra.mxu0 %v66
    %165 = vmatprep.subr.mxu0 0.0
    %166 = vmatpush2.msra.mxu0 %v65
    %167 = vmatprep.subr.mxu0 0.0
    %168 = vmatpush2.msra.mxu0 %v64
    %169 = vmatprep.subr.mxu0 0.0
    %170 = vmatpush2.msra.mxu0 %v63
    %171 = vmatprep.subr.mxu0 0.0
    %172 = vmatpush2.msra.mxu0 %v62
    %173 = vmatprep.subr.mxu0 0.0
    %174 = vmatpush2.msra.mxu0 %v61
    %175 = vmatprep.subr.mxu0 0.0
    %176 = vmatpush2.msra.mxu0 %v60
    %177 = vmatprep.subr.mxu0 0.0
    %178 = vmatpush2.msra.mxu0 %v59
    %179 = vmatprep.subr.mxu0 0.0
    %180 = vmatpush2.msra.mxu0 %v58
    %181 = vmatprep.subr.mxu0 0.0
    %182 = vmatpush2.msra.mxu0 %v57
    %183 = vmatprep.subr.mxu0 0.0
    %184 = vmatpush2.msra.mxu0 %v56
    %185 = vmatprep.subr.mxu0 0.0
    %186 = vmatpush2.msra.mxu0 %v55
    %187 = vmatprep.subr.mxu0 0.0
    %188 = vmatpush2.msra.mxu0 %v54
    %189 = vmatprep.subr.mxu0 0.0
    %190 = vmatpush2.msra.mxu0 %v53
    %191 = vmatprep.subr.mxu0 0.0
    %192 = vmatpush2.msra.mxu0 %v52
    %193 = vmatprep.mubr.f32.mxu0 %v123
    %194 = vmatmul.mubr.f32.gmra.mxu0 %v115
    %v195 = vpop.f32.mrf.mxu0
    %v196 = vadd.f32 %v105, %v195
    %v197 = vpop.f32.mrf.mxu0
    %198 = vdwg.mxu0
    %199 = vmatprep.subr.mxu0 0.0
    %200 = vmatpush1.msra.mxu0 %v83
    %201 = vmatprep.subr.mxu0 0.0
    %202 = vmatpush1.msra.mxu0 %v82
    %203 = vmatprep.subr.mxu0 0.0
    %204 = vmatpush1.msra.mxu0 %v81
    %205 = vmatprep.subr.mxu0 0.0
    %206 = vmatpush1.msra.mxu0 %v80
    %207 = vmatprep.subr.mxu0 0.0
    %208 = vmatpush1.msra.mxu0 %v79
    %209 = vmatprep.subr.mxu0 0.0
    %210 = vmatpush1.msra.mxu0 %v78
    %211 = vmatprep.subr.mxu0 0.0
    %212 = vmatpush1.msra.mxu0 %v77
    %213 = vmatprep.subr.mxu0 0.0
    %214 = vmatpush1.msra.mxu0 %v76
    %215 = vmatprep.subr.mxu0 0.0
    %216 = vmatpush1.msra.mxu0 %v75
    %217 = vmatprep.subr.mxu0 0.0
    %218 = vmatpush1.msra.mxu0 %v74
    %219 = vmatprep.subr.mxu0 0.0
    %220 = vmatpush1.msra.mxu0 %v73
    %221 = vmatprep.subr.mxu0 0.0
    %222 = vmatpush1.msra.mxu0 %v72
    %223 = vmatprep.subr.mxu0 0.0
    %224 = vmatpush1.msra.mxu0 %v71
    %225 = vmatprep.subr.mxu0 0.0
    %226 = vmatpush1.msra.mxu0 %v70
    %227 = vmatprep.subr.mxu0 0.0
    %228 = vmatpush1.msra.mxu0 %v69
    %229 = vmatprep.subr.mxu0 0.0
    %230 = vmatpush1.msra.mxu0 %v68
    %231 = vmatprep.subr.mxu0 0.0
    %232 = vmatpush2.msra.mxu0 %v99
    %233 = vmatprep.subr.mxu0 0.0
    %234 = vmatpush2.msra.mxu0 %v98
    %235 = vmatprep.subr.mxu0 0.0
    %236 = vmatpush2.msra.mxu0 %v97
    %237 = vmatprep.subr.mxu0 0.0
    %238 = vmatpush2.msra.mxu0 %v96
    %239 = vmatprep.subr.mxu0 0.0
    %240 = vmatpush2.msra.mxu0 %v95
    %241 = vmatprep.subr.mxu0 0.0
    %242 = vmatpush2.msra.mxu0 %v94
    %243 = vmatprep.subr.mxu0 0.0
    %244 = vmatpush2.msra.mxu0 %v93
    %245 = vmatprep.subr.mxu0 0.0
    %246 = vmatpush2.msra.mxu0 %v92
    %247 = vmatprep.subr.mxu0 0.0
    %248 = vmatpush2.msra.mxu0 %v91
    %249 = vmatprep.subr.mxu0 0.0
    %250 = vmatpush2.msra.mxu0 %v90
    %251 = vmatprep.subr.mxu0 0.0
    %252 = vmatpush2.msra.mxu0 %v89
    %253 = vmatprep.subr.mxu0 0.0
    %254 = vmatpush2.msra.mxu0 %v88
    %255 = vmatprep.subr.mxu0 0.0
    %256 = vmatpush2.msra.mxu0 %v87
    %257 = vmatprep.subr.mxu0 0.0
    %258 = vmatpush2.msra.mxu0 %v86
    %259 = vmatprep.subr.mxu0 0.0
    %260 = vmatpush2.msra.mxu0 %v85
    %261 = vmatprep.subr.mxu0 0.0
    %262 = vmatpush2.msra.mxu0 %v84
    %263 = vmatprep.mubr.f32.mxu0 %v124
    %264 = vmatmul.mubr.f32.gmra.mxu0 %v122
    %v265 = vpop.f32.mrf.mxu0
    %v266 = vadd.f32 %v196, %v265
    %v267 = vpop.f32.mrf.mxu0
    %268 = vdwg.mxu0
    %v269 = vmax.f32 %v266, 0.0
    %v270 = vld [vmem:[%s3] sm:$0xff]
    %v271 = vld [vmem:[%s3 + $0x8] sm:$0xff]
    %v272 = vld [vmem:[%s3 + $0x10] sm:$0xff]
    %v273 = vld [vmem:[%s3 + $0x18] sm:$0xff]
    %v274 = vld [vmem:[%s4] sm:$0x1]
    %v276 = vlaneseq
    %v277 = vshrl.u32 %v276, 7
    %v278 = vsub.s32 0, %v277
    %v279 = vrot.slane %v274, %v278
    %vm281 = vcmask 261120
    %v283 = vsel %vm281, %v269, 0
    %285 = vmatprep.subr.mxu0 0.0
    %286 = vmatpush1.msra.mxu0 0.0
    %287 = vmatprep.subr.mxu0 0.0
    %288 = vmatpush1.msra.mxu0 0.0
    %289 = vmatprep.subr.mxu0 0.0
    %290 = vmatpush1.msra.mxu0 0.0
    %291 = vmatprep.subr.mxu0 0.0
    %292 = vmatpush1.msra.mxu0 0.0
    %293 = vmatprep.subr.mxu0 0.0
    %294 = vmatpush1.msra.mxu0 0.0
    %295 = vmatprep.subr.mxu0 0.0
    %296 = vmatpush1.msra.mxu0 0.0
    %297 = vmatprep.subr.mxu0 0.0
    %298 = vmatpush1.msra.mxu0 0.0
    %299 = vmatprep.subr.mxu0 0.0
    %300 = vmatpush1.msra.mxu0 0.0
    %301 = vmatprep.subr.mxu0 0.0
    %302 = vmatpush1.msra.mxu0 0.0
    %303 = vmatprep.subr.mxu0 0.0
    %304 = vmatpush1.msra.mxu0 0.0
    %305 = vmatprep.subr.mxu0 0.0
    %306 = vmatpush1.msra.mxu0 0.0
    %307 = vmatprep.subr.mxu0 0.0
    %308 = vmatpush1.msra.mxu0 0.0
    %309 = vmatprep.subr.mxu0 0.0
    %310 = vmatpush1.msra.mxu0 %v273
    %311 = vmatprep.subr.mxu0 0.0
    %312 = vmatpush1.msra.mxu0 %v272
    %313 = vmatprep.subr.mxu0 0.0
    %314 = vmatpush1.msra.mxu0 %v271
    %315 = vmatprep.subr.mxu0 0.0
    %316 = vmatpush1.msra.mxu0 %v270
    %317 = vmatprep.subr.mxu0 0.0
    %318 = vmatpush2.msra.mxu0 0.0
    %319 = vmatprep.subr.mxu0 0.0
    %320 = vmatpush2.msra.mxu0 0.0
    %321 = vmatprep.subr.mxu0 0.0
    %322 = vmatpush2.msra.mxu0 0.0
    %323 = vmatprep.subr.mxu0 0.0
    %324 = vmatpush2.msra.mxu0 0.0
    %325 = vmatprep.subr.mxu0 0.0
    %326 = vmatpush2.msra.mxu0 0.0
    %327 = vmatprep.subr.mxu0 0.0
    %328 = vmatpush2.msra.mxu0 0.0
    %329 = vmatprep.subr.mxu0 0.0
    %330 = vmatpush2.msra.mxu0 0.0
    %331 = vmatprep.subr.mxu0 0.0
    %332 = vmatpush2.msra.mxu0 0.0
    %333 = vmatprep.subr.mxu0 0.0
    %334 = vmatpush2.msra.mxu0 0.0
    %335 = vmatprep.subr.mxu0 0.0
    %336 = vmatpush2.msra.mxu0 0.0
    %337 = vmatprep.subr.mxu0 0.0
    %338 = vmatpush2.msra.mxu0 0.0
    %339 = vmatprep.subr.mxu0 0.0
    %340 = vmatpush2.msra.mxu0 0.0
    %341 = vmatprep.subr.mxu0 0.0
    %342 = vmatpush2.msra.mxu0 0.0
    %343 = vmatprep.subr.mxu0 0.0
    %344 = vmatpush2.msra.mxu0 0.0
    %345 = vmatprep.subr.mxu0 0.0
    %346 = vmatpush2.msra.mxu0 0.0
    %347 = vmatprep.subr.mxu0 0.0
    %348 = vmatpush2.msra.mxu0 0.0
    %349 = vmatprep.mubr.f32.mxu0 0.0
    %350 = vmatmul.mubr.f32.gmra.mxu0 %v283
    %v351 = vpop.f32.mrf.mxu0
    %v352 = vadd.f32 %v279, %v351
    %v353 = vpop.f32.mrf.mxu0
    %354 = vdwg.mxu0
    %vm355 = vcmask 74752
    %356 = vst.msk [vmem:[#allocation5] sm:$0x3] %vm355, %v352
    // Predicated region
    $region26: #{_forward_impl.3} parent=1 // pred_check
      _
    $region27: #{_forward_impl.3} parent=1 // pred_check_branch
      %358 = sbr.rel (0) target = $region29
    $region28: #{_forward_impl.3} parent=1 // pred_region
      %s360 = ssub.s32 32, 32
      %361 = vsyncadd [#allocation4], %s360
      %s363 = sshll.u32 [#allocation5], 4
      %s364 = int_to_ptr.vmem [resolvable:$true] %s363
      %366 = dma.vmem_to_hbm [thread:$0]  %s364, 32, %s5, [#allocation4]
    $region29: #{_forward_impl.3} parent=1 // pred_fallthru
      _
    // Predicated region
    $region30: #{_forward_impl.3} parent=1 // pred_check
      _
    $region31: #{_forward_impl.3} parent=1 // pred_check_branch
      %368 = sbr.rel (0) target = $region33
    $region32: #{_forward_impl.3} parent=1 // pred_region
      %369 = dma.done [#allocation4], 32
    $region33: #{_forward_impl.3} parent=1 // pred_fallthru
      _
    %370 = vsyncpa [#allocation3], 1
    %371 = vsyncpa [#allocation4], 1

// kernel: _forward_impl.2
$region0: #{_forward_impl.2}
  #allocation0 [shape = 'u32[]', space=smem, size = 0x4, offset = 0x4, fixed_abs, tag = 'smem constant byte address 0x4 - core index']
  #allocation1 [shape = 'u32[144,128]{1,0:T(1,128)}', space=vmem, size = 0x12000, scoped, tag = 'internal scratch']
  %s0 = inlined_call_operand.vmem [shape: f32[2,4,256], index: 0, kind: input, shape index: {}]
  %s1 = inlined_call_operand.vmem [shape: f32[8,36], index: 1, kind: input, shape index: {}]
  %s2 = inlined_call_operand.vmem [shape: f32[8,1], index: 2, kind: input, shape index: {}]
  %s3 = inlined_call_operand.vmem [shape: f32[3,256], index: 3, kind: input, shape index: {}, may-alias: {3,6}]
  %s4 = inlined_call_operand.vmem [shape: f32[8,72], index: 4, kind: input, shape index: {}]
  %s5 = inlined_call_operand.vmem [shape: f32[8,1], index: 5, kind: input, shape index: {}]
  %s6 = inlined_call_operand.vmem [shape: f32[3,256], index: 6, kind: input, shape index: {}, may-alias: {3,6}]
  %s7 = inlined_call_operand.hbm [shape: f32[256,64], index: 7, kind: input, shape index: {}]
  %s8 = inlined_call_operand.vmem [shape: f32[2,8,64], index: 8, kind: output, shape index: {}]
  %s9 = sld [smem:[#allocation0]]
  $region69: #{_forward_impl.2} parent=0
    _
  %s11 = ssub.s32 1, %s9
  %s12 = scalar_select 0, %s11, %s9
  $region1: #{_forward_impl.2} parent=0
    #allocation2 [shape = 'u8[131072]{0}', space=vmem, size = 0x20000, scoped, tag = 'input window, operand 7, single buffered']
    #allocation3 [shape = 's32[2]{0}', space=sflag, size = 0x8, scoped, tag = 'scoped memory for _forward_impl.2']
    %13 = vsyncpa [#allocation3], 0
    loop: start=0, step=1, limit=4
    $region2: #{_forward_impl.2} parent=1 // loop_pre_header
      _
    $region3: #{_forward_impl.2} parent=1 // loop_header
      %s15 = sphi 0, %s19
      %p16 = scmp.ge.s32.totalorder %s15, 4
      %s25 = sphi 0, %s27
      %s28 = sphi 0, %s25
      %s29 = sphi 0, %s28
      %s45 = sphi 0, %s29
      %s49 = sphi 0, %s49
      %s51 = sphi 0, %s49
      %s52 = sphi 0, %s51
      %s66 = sphi 0, %s52
      %s70 = sphi 0, %s70
      %s72 = sphi 0, %s70
      %s73 = sphi 0, %s72
      %s87 = sphi 0, %s73
      %s91 = sphi 0, %s91
      %s93 = sphi 0, %s91
      %s94 = sphi 0, %s93
      %s108 = sphi 0, %s94
      %s112 = sphi 0, %s112
      %s114 = sphi 0, %s112
      %s115 = sphi 0, %s114
      %s129 = sphi 0, %s115
      %s133 = sphi 0, %s133
      %s135 = sphi 0, %s133
      %s136 = sphi 0, %s135
      %s150 = sphi 0, %s136
      %s154 = sphi 0, %s154
      %s156 = sphi 0, %s154
      %s157 = sphi 0, %s156
      %s171 = sphi 0, %s157
      %s175 = sphi 0, %s175
      %s177 = sphi 0, %s175
      %s178 = sphi 0, %s177
      %s192 = sphi 0, %s178
      %s198 = sphi 0, %s200
      %s201 = sphi 0, %s198
      %s202 = sphi 0, %s201
      %s218 = sphi 0, %s202
    $region4: #{_forward_impl.2} parent=1 // loop_header_branch
      %18 = sbr.rel (%p16) target = $region8
    $region5: #{_forward_impl.2} parent=1 // loop_body
      %s20 = ssub.s32 %s15, 1
      %s21 = ssub.s32 %s15, 2
      %s22 = sadd.s32 %s15, 1
      %s23 = ssub.s32 %s15, %s22
      %p24 = scmp.eq.s32.totalorder %s23, 0
      %s26 = sadd.s32 %s25, 1
      %s27 = scalar_select %p24, %s25, %s26
      %p30 = pneg %p24
      %p31 = scmp.eq.s32.totalorder %s15, 1
      %p32 = por %p30, %p31
      %p33 = scmp.ne.s32.totalorder %s25, %s28
      %p34 = scmp.eq.s32.totalorder %s15, 0
      %p35 = por %p33, %p34
      %p36 = scmp.ne.s32.totalorder %s25, %s28
      %p37 = scmp.eq.s32.totalorder %s20, 1
      %p38 = por %p36, %p37
      %p39 = scmp.ne.s32.totalorder %s28, %s29
      %p40 = scmp.eq.s32.totalorder %s20, 0
      %p41 = por %p39, %p40
      %p42 = scmp.ne.s32.totalorder %s28, %s29
      %p43 = scmp.eq.s32.totalorder %s21, 1
      %p44 = por %p42, %p43
      %p46 = scmp.ne.s32.totalorder %s29, %s45
      %p47 = scmp.eq.s32.totalorder %s21, 0
      %p48 = por %p46, %p47
      %s50 = sadd.s32 %s49, 1
      %p53 = scmp.eq.s32.totalorder %s15, 1
      %p54 = scmp.ne.s32.totalorder %s49, %s51
      %p55 = scmp.eq.s32.totalorder %s15, 0
      %p56 = por %p54, %p55
      %p57 = scmp.ne.s32.totalorder %s49, %s51
      %p58 = scmp.eq.s32.totalorder %s20, 1
      %p59 = por %p57, %p58
      %p60 = scmp.ne.s32.totalorder %s51, %s52
      %p61 = scmp.eq.s32.totalorder %s20, 0
      %p62 = por %p60, %p61
      %p63 = scmp.ne.s32.totalorder %s51, %s52
      %p64 = scmp.eq.s32.totalorder %s21, 1
      %p65 = por %p63, %p64
      %p67 = scmp.ne.s32.totalorder %s52, %s66
      %p68 = scmp.eq.s32.totalorder %s21, 0
      %p69 = por %p67, %p68
      %s71 = sadd.s32 %s70, 1
      %p74 = scmp.eq.s32.totalorder %s15, 1
      %p75 = scmp.ne.s32.totalorder %s70, %s72
      %p76 = scmp.eq.s32.totalorder %s15, 0
      %p77 = por %p75, %p76
      %p78 = scmp.ne.s32.totalorder %s70, %s72
      %p79 = scmp.eq.s32.totalorder %s20, 1
      %p80 = por %p78, %p79
      %p81 = scmp.ne.s32.totalorder %s72, %s73
      %p82 = scmp.eq.s32.totalorder %s20, 0
      %p83 = por %p81, %p82
      %p84 = scmp.ne.s32.totalorder %s72, %s73
      %p85 = scmp.eq.s32.totalorder %s21, 1
      %p86 = por %p84, %p85
      %p88 = scmp.ne.s32.totalorder %s73, %s87
      %p89 = scmp.eq.s32.totalorder %s21, 0
      %p90 = por %p88, %p89
      %s92 = sadd.s32 %s91, 1
      %p95 = scmp.eq.s32.totalorder %s15, 1
      %p96 = scmp.ne.s32.totalorder %s91, %s93
      %p97 = scmp.eq.s32.totalorder %s15, 0
      %p98 = por %p96, %p97
      %p99 = scmp.ne.s32.totalorder %s91, %s93
      %p100 = scmp.eq.s32.totalorder %s20, 1
      %p101 = por %p99, %p100
      %p102 = scmp.ne.s32.totalorder %s93, %s94
      %p103 = scmp.eq.s32.totalorder %s20, 0
      %p104 = por %p102, %p103
      %p105 = scmp.ne.s32.totalorder %s93, %s94
      %p106 = scmp.eq.s32.totalorder %s21, 1
      %p107 = por %p105, %p106
      %p109 = scmp.ne.s32.totalorder %s94, %s108
      %p110 = scmp.eq.s32.totalorder %s21, 0
      %p111 = por %p109, %p110
      %s113 = sadd.s32 %s112, 1
      %p116 = scmp.eq.s32.totalorder %s15, 1
      %p117 = scmp.ne.s32.totalorder %s112, %s114
      %p118 = scmp.eq.s32.totalorder %s15, 0
      %p119 = por %p117, %p118
      %p120 = scmp.ne.s32.totalorder %s112, %s114
      %p121 = scmp.eq.s32.totalorder %s20, 1
      %p122 = por %p120, %p121
      %p123 = scmp.ne.s32.totalorder %s114, %s115
      %p124 = scmp.eq.s32.totalorder %s20, 0
      %p125 = por %p123, %p124
      %p126 = scmp.ne.s32.totalorder %s114, %s115
      %p127 = scmp.eq.s32.totalorder %s21, 1
      %p128 = por %p126, %p127
      %p130 = scmp.ne.s32.totalorder %s115, %s129
      %p131 = scmp.eq.s32.totalorder %s21, 0
      %p132 = por %p130, %p131
      %s134 = sadd.s32 %s133, 1
      %p137 = scmp.eq.s32.totalorder %s15, 1
      %p138 = scmp.ne.s32.totalorder %s133, %s135
      %p139 = scmp.eq.s32.totalorder %s15, 0
      %p140 = por %p138, %p139
      %p141 = scmp.ne.s32.totalorder %s133, %s135
      %p142 = scmp.eq.s32.totalorder %s20, 1
      %p143 = por %p141, %p142
      %p144 = scmp.ne.s32.totalorder %s135, %s136
      %p145 = scmp.eq.s32.totalorder %s20, 0
      %p146 = por %p144, %p145
      %p147 = scmp.ne.s32.totalorder %s135, %s136
      %p148 = scmp.eq.s32.totalorder %s21, 1
      %p149 = por %p147, %p148
      %p151 = scmp.ne.s32.totalorder %s136, %s150
      %p152 = scmp.eq.s32.totalorder %s21, 0
      %p153 = por %p151, %p152
      %s155 = sadd.s32 %s154, 1
      %p158 = scmp.eq.s32.totalorder %s15, 1
      %p159 = scmp.ne.s32.totalorder %s154, %s156
      %p160 = scmp.eq.s32.totalorder %s15, 0
      %p161 = por %p159, %p160
      %p162 = scmp.ne.s32.totalorder %s154, %s156
      %p163 = scmp.eq.s32.totalorder %s20, 1
      %p164 = por %p162, %p163
      %p165 = scmp.ne.s32.totalorder %s156, %s157
      %p166 = scmp.eq.s32.totalorder %s20, 0
      %p167 = por %p165, %p166
      %p168 = scmp.ne.s32.totalorder %s156, %s157
      %p169 = scmp.eq.s32.totalorder %s21, 1
      %p170 = por %p168, %p169
      %p172 = scmp.ne.s32.totalorder %s157, %s171
      %p173 = scmp.eq.s32.totalorder %s21, 0
      %p174 = por %p172, %p173
      %s176 = sadd.s32 %s175, 1
      %p179 = scmp.eq.s32.totalorder %s15, 1
      %p180 = scmp.ne.s32.totalorder %s175, %s177
      %p181 = scmp.eq.s32.totalorder %s15, 0
      %p182 = por %p180, %p181
      %p183 = scmp.ne.s32.totalorder %s175, %s177
      %p184 = scmp.eq.s32.totalorder %s20, 1
      %p185 = por %p183, %p184
      %p186 = scmp.ne.s32.totalorder %s177, %s178
      %p187 = scmp.eq.s32.totalorder %s20, 0
      %p188 = por %p186, %p187
      %p189 = scmp.ne.s32.totalorder %s177, %s178
      %p190 = scmp.eq.s32.totalorder %s21, 1
      %p191 = por %p189, %p190
      %p193 = scmp.ne.s32.totalorder %s178, %s192
      %p194 = scmp.eq.s32.totalorder %s21, 0
      %p195 = por %p193, %p194
      %s196 = ssub.s32 %s15, %s22
      %p197 = scmp.eq.s32.totalorder %s196, 0
      %s199 = sadd.s32 %s198, 1
      %s200 = scalar_select %p197, %s198, %s199
      %p203 = pneg %p197
      %p204 = scmp.eq.s32.totalorder %s15, 1
      %p205 = por %p203, %p204
      %p206 = scmp.ne.s32.totalorder %s198, %s201
      %p207 = scmp.eq.s32.totalorder %s15, 0
      %p208 = por %p206, %p207
      %p209 = scmp.ne.s32.totalorder %s198, %s201
      %p210 = scmp.eq.s32.totalorder %s20, 1
      %p211 = por %p209, %p210
      %p212 = scmp.ne.s32.totalorder %s201, %s202
      %p213 = scmp.eq.s32.totalorder %s20, 0
      %p214 = por %p212, %p213
      %p215 = scmp.ne.s32.totalorder %s201, %s202
      %p216 = scmp.eq.s32.totalorder %s21, 1
      %p217 = por %p215, %p216
      %p219 = scmp.ne.s32.totalorder %s202, %s218
      %p220 = scmp.eq.s32.totalorder %s21, 0
      %p221 = por %p219, %p220
      %p222 = scmp.le.s32.totalorder 1, %s15
      %p223 = scmp.lt.s32.totalorder %s15, 3
      %p224 = pnand %p222, %p223
      %p225 = pneg %p224
      // Predicated region
      $region9: #{_forward_impl.2} parent=5 // pred_check
        _
      $region10: #{_forward_impl.2} parent=5 // pred_check_branch
        %227 = sbr.rel (%p224) target = $region12
      $region11: #{_forward_impl.2} parent=5 // pred_region
        %s228 = ssub.s32 %s15, 1
        // Predicated region
        $region13: #{_forward_impl.2} parent=11 // pred_check
          %p229 = pneg %p62
        $region14: #{_forward_impl.2} parent=11 // pred_check_branch
          %231 = sbr.rel (%p229) target = $region16
        $region15: #{_forward_impl.2} parent=11 // pred_region
          _
        $region16: #{_forward_impl.2} parent=11 // pred_fallthru
          _
        // Predicated region
        $region17: #{_forward_impl.2} parent=11 // pred_check
          %p232 = pneg %p83
        $region18: #{_forward_impl.2} parent=11 // pred_check_branch
          %234 = sbr.rel (%p232) target = $region20
        $region19: #{_forward_impl.2} parent=11 // pred_region
          _
        $region20: #{_forward_impl.2} parent=11 // pred_fallthru
          _
        // Predicated region
        $region21: #{_forward_impl.2} parent=11 // pred_check
          %p235 = pneg %p104
        $region22: #{_forward_impl.2} parent=11 // pred_check_branch
          %237 = sbr.rel (%p235) target = $region24
        $region23: #{_forward_impl.2} parent=11 // pred_region
          _
        $region24: #{_forward_impl.2} parent=11 // pred_fallthru
          _
        // Predicated region
        $region25: #{_forward_impl.2} parent=11 // pred_check
          %p238 = pneg %p125
        $region26: #{_forward_impl.2} parent=11 // pred_check_branch
          %240 = sbr.rel (%p238) target = $region28
        $region27: #{_forward_impl.2} parent=11 // pred_region
          _
        $region28: #{_forward_impl.2} parent=11 // pred_fallthru
          _
        // Predicated region
        $region29: #{_forward_impl.2} parent=11 // pred_check
          %p241 = pneg %p146
        $region30: #{_forward_impl.2} parent=11 // pred_check_branch
          %243 = sbr.rel (%p241) target = $region32
        $region31: #{_forward_impl.2} parent=11 // pred_region
          _
        $region32: #{_forward_impl.2} parent=11 // pred_fallthru
          _
        // Predicated region
        $region33: #{_forward_impl.2} parent=11 // pred_check
          %p244 = pneg %p167
        $region34: #{_forward_impl.2} parent=11 // pred_check_branch
          %246 = sbr.rel (%p244) target = $region36
        $region35: #{_forward_impl.2} parent=11 // pred_region
          _
        $region36: #{_forward_impl.2} parent=11 // pred_fallthru
          _
        // Predicated region
        $region37: #{_forward_impl.2} parent=11 // pred_check
          %p247 = pneg %p188
        $region38: #{_forward_impl.2} parent=11 // pred_check_branch
          %249 = sbr.rel (%p247) target = $region40
        $region39: #{_forward_impl.2} parent=11 // pred_region
          %s251 = ssub.s32 4096, 4096
          %252 = vsyncadd [#allocation3], %s251
          %s253 = sshll.u32 [#allocation2], 4
          %s254 = int_to_ptr.vmem [resolvable:$true] %s253
          %259 = dma.hbm_to_vmem [thread:$0]  %s7, 4096, %s254, [#allocation3], 128, 128, 8
        $region40: #{_forward_impl.2} parent=11 // pred_fallthru
          _
      $region12: #{_forward_impl.2} parent=5 // pred_fallthru
        _
      %p260 = scmp.lt.s32.totalorder %s15, 2
      // Predicated region
      $region41: #{_forward_impl.2} parent=5 // pred_check
        %p261 = pneg %p260
      $region42: #{_forward_impl.2} parent=5 // pred_check_branch
        %263 = sbr.rel (%p261) target = $region44
      $region43: #{_forward_impl.2} parent=5 // pred_region
        // Predicated region
        $region45: #{_forward_impl.2} parent=43 // pred_check
          %p264 = pneg %p35
        $region46: #{_forward_impl.2} parent=43 // pred_check_branch
          %266 = sbr.rel (%p264) target = $region48
        $region47: #{_forward_impl.2} parent=43 // pred_region
          %p267 = scmp.lt.s32.totalorder %s15, 1
          %s268 = scalar_select %p267, %s15, 1
          %s269 = smul.addr %s268, 2
          %s270 = smul.addr %s269, 4
          %s271 = scalar_lea.vmem %s0, %s270
        $region48: #{_forward_impl.2} parent=43 // pred_fallthru
          _
      $region44: #{_forward_impl.2} parent=5 // pred_fallthru
        _
      %p272 = scmp.le.s32.totalorder 1, %s15
      %p273 = scmp.lt.s32.totalorder %s15, 3
      %p274 = pnand %p272, %p273
      %p275 = pneg %p274
      // Predicated region
      $region49: #{_forward_impl.2} parent=5 // pred_check
        _
      $region50: #{_forward_impl.2} parent=5 // pred_check_branch
        %277 = sbr.rel (%p274) target = $region52
      $region51: #{_forward_impl.2} parent=5 // pred_region
        %s278 = ssub.s32 %s15, 1
        // Predicated region
        $region53: #{_forward_impl.2} parent=51 // pred_check
          %p279 = pneg %p188
        $region54: #{_forward_impl.2} parent=51 // pred_check_branch
          %281 = sbr.rel (%p279) target = $region56
        $region55: #{_forward_impl.2} parent=51 // pred_region
          %282 = dma.done [#allocation3], 4096
        $region56: #{_forward_impl.2} parent=51 // pred_fallthru
          _
        %p283 = scmp.lt.s32.totalorder %s20, 1
        %s284 = scalar_select %p283, %s20, 1
        %s285 = smul.addr %s284, 2
        %s286 = smul.addr %s285, 4
        %s287 = scalar_lea.vmem %s0, %s286
        %p288 = pneg %p41
        %p289 = pneg %p38
        %p290 = pneg %p62
        %p291 = pneg %p59
        %p292 = pneg %p83
        %p293 = pneg %p80
        %p294 = pneg %p104
        %p295 = pneg %p101
        %p296 = pneg %p125
        %p297 = pneg %p122
        %p298 = pneg %p146
        %p299 = pneg %p143
        %p300 = pneg %p167
        %p301 = pneg %p164
        %p302 = pneg %p188
        %p303 = pneg %p185
        %p304 = pneg %p214
        %p305 = pneg %p211
        %p306 = scmp.lt.s32.totalorder %s20, 1
        %s307 = scalar_select %p306, %s20, 1
        %s308 = smul.addr %s307, 8
        %s309 = scalar_lea.vmem %s8, %s308
        %p310 = scmp.lt.s32.totalorder %s20, 1
        %s311 = scalar_select %p310, %s20, 1
        %s312 = smul.addr %s311, 2
        %s313 = smul.addr %s312, 4
        %s314 = scalar_lea.vmem %s0, %s313
        %p315 = scmp.lt.s32.totalorder %s20, 1
        %s316 = scalar_select %p315, %s20, 1
        %s317 = smul.addr %s316, 8
        %s318 = scalar_lea.vmem %s8, %s317
        %v319 = vld [vmem:[%s314] sm:$0xff]
        %v320 = vld [vmem:[%s3] sm:$0x77]
        %v322 = vcombine.high %v319, %v319
        %323 = vrot.lane.b32.xlu0 %v319, 17
        %v324 = vpop.permute.xlu0 %323
        %325 = vrot.lane.b32.xlu0 %v322, 17
        %v326 = vpop.permute.xlu0 %325
        %vm327 = vcmask 138240
        %v328 = vsel %vm327, %v324, %v326
        %v331 = vsel %vm327, 0.0, %v324
        %v333 = vlaneseq
        %v334 = vshrl.u32 %v333, 7
        %v335 = vsub.s32 0, %v334
        %v336 = vrot.slane %v320, %v335
        %v337 = vlaneseq
        %v338 = vshrl.u32 %v337, 7
        %v339 = vsub.s32 4, %v338
        %v340 = vrot.slane %v320, %v339
        %v343 = vlaneseq
        %v344 = vshrl.u32 %v343, 7
        %v345 = vsub.s32 0, %v344
        %v346 = vrot.slane %v336, %v345
        %v347 = vlaneseq
        %v348 = vshrl.u32 %v347, 7
        %v349 = vsub.s32 0, %v348
        %v350 = vrot.slane %v340, %v349
        %v351 = vmul.f32 %v331, %v346
        %v352 = vmul.f32 %v328, %v350
        %353 = vrot.lane.b32.xlu0 %v319, 16
        %v354 = vpop.permute.xlu0 %353
        %355 = vrot.lane.b32.xlu0 %v322, 16
        %v356 = vpop.permute.xlu0 %355
        %vm357 = vcmask 130048
        %v358 = vsel %vm357, %v354, %v356
        %v360 = vsel %vm357, 0.0, %v354
        %361 = vrot.lane.b32.xlu0 %v319, 15
        %v362 = vpop.permute.xlu0 %361
        %363 = vrot.lane.b32.xlu0 %v322, 15
        %v364 = vpop.permute.xlu0 %363
        %vm365 = vcmask 121856
        %v366 = vsel %vm365, %v362, %v364
        %v369 = vsel %vm365, 0.0, %v362
        %v370 = vlaneseq
        %v371 = vshrl.u32 %v370, 7
        %v372 = vsub.s32 2, %v371
        %v373 = vrot.slane %v320, %v372
        %v374 = vlaneseq
        %v375 = vshrl.u32 %v374, 7
        %v376 = vsub.s32 6, %v375
        %v377 = vrot.slane %v320, %v376
        %v380 = vlaneseq
        %v381 = vshrl.u32 %v380, 7
        %v382 = vsub.s32 2, %v381
        %v383 = vrot.slane %v373, %v382
        %v384 = vlaneseq
        %v385 = vshrl.u32 %v384, 7
        %v386 = vsub.s32 2, %v385
        %v387 = vrot.slane %v377, %v386
        %v388 = vmul.f32 %v369, %v383
        %v389 = vmul.f32 %v366, %v387
        %390 = vrot.lane.b32.xlu0 %v319, 1
        %v391 = vpop.permute.xlu0 %390
        %392 = vrot.lane.b32.xlu0 %v322, 1
        %v393 = vpop.permute.xlu0 %392
        %vm394 = vcmask 7168
        %v395 = vsel %vm394, %v391, %v393
        %v398 = vsel %vm394, 0.0, %v391
        %v399 = vmul.f32 %v398, %v346
        %v400 = vmul.f32 %v395, %v350
        %401 = vrot.lane.b32.xlu0 %v319, 127
        %v402 = vpop.permute.xlu0 %401
        %403 = vrot.lane.b32.xlu0 %v322, 127
        %v404 = vpop.permute.xlu0 %403
        %vm405 = vcmask 1039360
        %v406 = vsel %vm405, %v402, %v404
        %v409 = vsel %vm405, %v404, 0.0
        %v410 = vmul.f32 %v406, %v383
        %v411 = vmul.f32 %v409, %v387
        %412 = vrot.lane.b32.xlu0 %v319, 113
        %v413 = vpop.permute.xlu0 %412
        %414 = vrot.lane.b32.xlu0 %v322, 113
        %v415 = vpop.permute.xlu0 %414
        %vm416 = vcmask 924672
        %v417 = vsel %vm416, %v413, %v415
        %v420 = vsel %vm416, %v415, 0.0
        %v421 = vmul.f32 %v417, %v346
        %v422 = vmul.f32 %v420, %v350
        %423 = vrot.lane.b32.xlu0 %v319, 112
        %v424 = vpop.permute.xlu0 %423
        %425 = vrot.lane.b32.xlu0 %v322, 112
        %v426 = vpop.permute.xlu0 %425
        %vm427 = vcmask 916480
        %v428 = vsel %vm427, %v424, %v426
        %v430 = vsel %vm427, %v426, 0.0
        %431 = vrot.lane.b32.xlu0 %v319, 111
        %v432 = vpop.permute.xlu0 %431
        %433 = vrot.lane.b32.xlu0 %v322, 111
        %v434 = vpop.permute.xlu0 %433
        %vm435 = vcmask 908288
        %v436 = vsel %vm435, %v432, %v434
        %v439 = vsel %vm435, %v434, 0.0
        %v440 = vmul.f32 %v436, %v383
        %v441 = vmul.f32 %v439, %v387
        %v443 = vrot.slane %v360, 4
        %v444 = vrot.slane %v358, 4
        %v449 = vrot.slane %v399, 4
        %v450 = vrot.slane %v400, 4
        %v456 = vrot.slane %v410, 4
        %v457 = vrot.slane %v411, 4
        %v461 = vrot.slane %v428, 4
        %v462 = vrot.slane %v430, 4
        %vm465 = vcmask 1043456
        %v466 = vsel %vm465, %v351, %v443
        %v467 = vsel %vm465, %v352, %v444
        %v468 = vsel %vm465, %v388, %v449
        %v469 = vsel %vm465, %v389, %v450
        %v470 = vsel %vm465, %v319, %v456
        %v471 = vsel %vm465, %v322, %v457
        %v472 = vsel %vm465, %v421, %v461
        %v473 = vsel %vm465, %v422, %v462
        %v474 = vld [vmem:[%s1] sm:$0xff]
        %v475 = vld [vmem:[%s2] sm:$0xff]
        %477 = vset.pattern.permute.xlu0 0
        %478 = vperm.xlu0 %477, %v475
        %v479 = vpop.permute.xlu0 %478
        %vm481 = vcmask 293888
        %v483 = vsel %vm481, %v474, 0
        %v486 = vsel %vm465, %v440, 0
        %v489 = vsel %vm465, %v441, 0
        %491 = vmatprep.subr.mxu0 0.0
        %492 = vmatpush1.msra.mxu0 0.0
        %493 = vmatprep.subr.mxu0 0.0
        %494 = vmatpush1.msra.mxu0 0.0
        %495 = vmatprep.subr.mxu0 0.0
        %496 = vmatpush1.msra.mxu0 0.0
        %497 = vmatprep.subr.mxu0 0.0
        %498 = vmatpush1.msra.mxu0 0.0
        %499 = vmatprep.subr.mxu0 0.0
        %500 = vmatpush1.msra.mxu0 0.0
        %501 = vmatprep.subr.mxu0 0.0
        %502 = vmatpush1.msra.mxu0 0.0
        %503 = vmatprep.subr.mxu0 0.0
        %504 = vmatpush1.msra.mxu0 0.0
        %505 = vmatprep.subr.mxu0 0.0
        %506 = vmatpush1.msra.mxu0 0.0
        %507 = vmatprep.subr.mxu0 0.0
        %508 = vmatpush1.msra.mxu0 0.0
        %509 = vmatprep.subr.mxu0 0.0
        %510 = vmatpush1.msra.mxu0 0.0
        %511 = vmatprep.subr.mxu0 0.0
        %512 = vmatpush1.msra.mxu0 0.0
        %513 = vmatprep.subr.mxu0 %v489
        %514 = vmatpush1.msra.mxu0 %v486
        %515 = vmatprep.subr.mxu0 %v473
        %516 = vmatpush1.msra.mxu0 %v472
        %517 = vmatprep.subr.mxu0 %v471
        %518 = vmatpush1.msra.mxu0 %v470
        %519 = vmatprep.subr.mxu0 %v469
        %520 = vmatpush1.msra.mxu0 %v468
        %521 = vmatprep.subr.mxu0 %v467
        %522 = vmatpush1.msra.mxu0 %v466
        %523 = vmatprep.subr.mxu0 0.0
        %524 = vmatpush2.msra.mxu0 0.0
        %525 = vmatprep.subr.mxu0 0.0
        %526 = vmatpush2.msra.mxu0 0.0
        %527 = vmatprep.subr.mxu0 0.0
        %528 = vmatpush2.msra.mxu0 0.0
        %529 = vmatprep.subr.mxu0 0.0
        %530 = vmatpush2.msra.mxu0 0.0
        %531 = vmatprep.subr.mxu0 0.0
        %532 = vmatpush2.msra.mxu0 0.0
        %533 = vmatprep.subr.mxu0 0.0
        %534 = vmatpush2.msra.mxu0 0.0
        %535 = vmatprep.subr.mxu0 0.0
        %536 = vmatpush2.msra.mxu0 0.0
        %537 = vmatprep.subr.mxu0 0.0
        %538 = vmatpush2.msra.mxu0 0.0
        %539 = vmatprep.subr.mxu0 0.0
        %540 = vmatpush2.msra.mxu0 0.0
        %541 = vmatprep.subr.mxu0 0.0
        %542 = vmatpush2.msra.mxu0 0.0
        %543 = vmatprep.subr.mxu0 0.0
        %544 = vmatpush2.msra.mxu0 0.0
        %545 = vmatprep.subr.mxu0 0.0
        %546 = vmatpush2.msra.mxu0 0.0
        %547 = vmatprep.subr.mxu0 0.0
        %548 = vmatpush2.msra.mxu0 0.0
        %549 = vmatprep.subr.mxu0 0.0
        %550 = vmatpush2.msra.mxu0 0.0
        %551 = vmatprep.subr.mxu0 0.0
        %552 = vmatpush2.msra.mxu0 0.0
        %553 = vmatprep.subr.mxu0 0.0
        %554 = vmatpush2.msra.mxu0 0.0
        %555 = vmatprep.mubr.f32.mxu0 0.0
        %556 = vmatmul.mubr.f32.gmra.mxu0 %v483
        %v557 = vpop.f32.mrf.mxu0
        %v558 = vadd.f32 %v479, %v557
        %v559 = vpop.f32.mrf.mxu0
        %v560 = vadd.f32 %v479, %v559
        %561 = vdwg.mxu0
        %v562 = vmax.f32 %v558, 0.0
        %v563 = vmax.f32 %v560, 0.0
        %v564 = vld [vmem:[%s6] sm:$0x77]
        %567 = vrot.lane.b32.xlu0 %v562, 17
        %v568 = vpop.permute.xlu0 %567
        %569 = vrot.lane.b32.xlu0 %v563, 17
        %v570 = vpop.permute.xlu0 %569
        %v571 = vsel %vm327, %v568, %v570
        %v574 = vsel %vm327, 0.0, %v568
        %v576 = vlaneseq
        %v577 = vshrl.u32 %v576, 7
        %v578 = vsub.s32 0, %v577
        %v579 = vrot.slane %v564, %v578
        %v580 = vlaneseq
        %v581 = vshrl.u32 %v580, 7
        %v582 = vsub.s32 4, %v581
        %v583 = vrot.slane %v564, %v582
        %v586 = vlaneseq
        %v587 = vshrl.u32 %v586, 7
        %v588 = vsub.s32 0, %v587
        %v589 = vrot.slane %v579, %v588
        %v590 = vlaneseq
        %v591 = vshrl.u32 %v590, 7
        %v592 = vsub.s32 0, %v591
        %v593 = vrot.slane %v583, %v592
        %v594 = vmul.f32 %v574, %v589
        %v595 = vmul.f32 %v571, %v593
        %596 = vrot.lane.b32.xlu0 %v562, 16
        %v597 = vpop.permute.xlu0 %596
        %598 = vrot.lane.b32.xlu0 %v563, 16
        %v599 = vpop.permute.xlu0 %598
        %v600 = vsel %vm357, %v597, %v599
        %v603 = vsel %vm357, 0.0, %v597
        %604 = vrot.lane.b32.xlu0 %v562, 15
        %v605 = vpop.permute.xlu0 %604
        %606 = vrot.lane.b32.xlu0 %v563, 15
        %v607 = vpop.permute.xlu0 %606
        %v608 = vsel %vm365, %v605, %v607
        %v611 = vsel %vm365, 0.0, %v605
        %v612 = vlaneseq
        %v613 = vshrl.u32 %v612, 7
        %v614 = vsub.s32 2, %v613
        %v615 = vrot.slane %v564, %v614
        %v616 = vlaneseq
        %v617 = vshrl.u32 %v616, 7
        %v618 = vsub.s32 6, %v617
        %v619 = vrot.slane %v564, %v618
        %v622 = vlaneseq
        %v623 = vshrl.u32 %v622, 7
        %v624 = vsub.s32 2, %v623
        %v625 = vrot.slane %v615, %v624
        %v626 = vlaneseq
        %v627 = vshrl.u32 %v626, 7
        %v628 = vsub.s32 2, %v627
        %v629 = vrot.slane %v619, %v628
        %v630 = vmul.f32 %v611, %v625
        %v631 = vmul.f32 %v608, %v629
        %632 = vrot.lane.b32.xlu0 %v562, 1
        %v633 = vpop.permute.xlu0 %632
        %634 = vrot.lane.b32.xlu0 %v563, 1
        %v635 = vpop.permute.xlu0 %634
        %v636 = vsel %vm394, %v633, %v635
        %v639 = vsel %vm394, 0.0, %v633
        %v640 = vmul.f32 %v639, %v589
        %v641 = vmul.f32 %v636, %v593
        %642 = vrot.lane.b32.xlu0 %v562, 127
        %v643 = vpop.permute.xlu0 %642
        %644 = vrot.lane.b32.xlu0 %v563, 127
        %v645 = vpop.permute.xlu0 %644
        %v646 = vsel %vm405, %v643, %v645
        %v649 = vsel %vm405, %v645, 0.0
        %v650 = vmul.f32 %v646, %v625
        %v651 = vmul.f32 %v649, %v629
        %652 = vrot.lane.b32.xlu0 %v562, 113
        %v653 = vpop.permute.xlu0 %652
        %654 = vrot.lane.b32.xlu0 %v563, 113
        %v655 = vpop.permute.xlu0 %654
        %v656 = vsel %vm416, %v653, %v655
        %v659 = vsel %vm416, %v655, 0.0
        %v660 = vmul.f32 %v656, %v589
        %v661 = vmul.f32 %v659, %v593
        %662 = vrot.lane.b32.xlu0 %v562, 112
        %v663 = vpop.permute.xlu0 %662
        %664 = vrot.lane.b32.xlu0 %v563, 112
        %v665 = vpop.permute.xlu0 %664
        %v666 = vsel %vm427, %v663, %v665
        %v669 = vsel %vm427, %v665, 0.0
        %670 = vrot.lane.b32.xlu0 %v562, 111
        %v671 = vpop.permute.xlu0 %670
        %672 = vrot.lane.b32.xlu0 %v563, 111
        %v673 = vpop.permute.xlu0 %672
        %v674 = vsel %vm435, %v671, %v673
        %v677 = vsel %vm435, %v673, 0.0
        %v678 = vmul.f32 %v674, %v625
        %v679 = vmul.f32 %v677, %v629
        %v680 = vld [vmem:[%s4] sm:$0xff]
        %v681 = vld [vmem:[%s5] sm:$0xff]
        %683 = vset.pattern.permute.xlu0 0
        %684 = vperm.xlu0 %683, %v681
        %v685 = vpop.permute.xlu0 %684
        %vm687 = vcmask 588800
        %v689 = vsel %vm687, %v680, 0
        %691 = vmatprep.subr.mxu0 0.0
        %692 = vmatpush1.msra.mxu0 0.0
        %693 = vmatprep.subr.mxu0 0.0
        %694 = vmatpush1.msra.mxu0 0.0
        %695 = vmatprep.subr.mxu0 0.0
        %696 = vmatpush1.msra.mxu0 0.0
        %697 = vmatprep.subr.mxu0 0.0
        %698 = vmatpush1.msra.mxu0 0.0
        %699 = vmatprep.subr.mxu0 0.0
        %700 = vmatpush1.msra.mxu0 0.0
        %701 = vmatprep.subr.mxu0 0.0
        %702 = vmatpush1.msra.mxu0 0.0
        %703 = vmatprep.subr.mxu0 0.0
        %704 = vmatpush1.msra.mxu0 0.0
        %705 = vmatprep.subr.mxu0 %v679
        %706 = vmatpush1.msra.mxu0 %v678
        %707 = vmatprep.subr.mxu0 %v669
        %708 = vmatpush1.msra.mxu0 %v666
        %709 = vmatprep.subr.mxu0 %v661
        %710 = vmatpush1.msra.mxu0 %v660
        %711 = vmatprep.subr.mxu0 %v651
        %712 = vmatpush1.msra.mxu0 %v650
        %713 = vmatprep.subr.mxu0 %v563
        %714 = vmatpush1.msra.mxu0 %v562
        %715 = vmatprep.subr.mxu0 %v641
        %716 = vmatpush1.msra.mxu0 %v640
        %717 = vmatprep.subr.mxu0 %v631
        %718 = vmatpush1.msra.mxu0 %v630
        %719 = vmatprep.subr.mxu0 %v600
        %720 = vmatpush1.msra.mxu0 %v603
        %721 = vmatprep.subr.mxu0 %v595
        %722 = vmatpush1.msra.mxu0 %v594
        %723 = vmatprep.subr.mxu0 0.0
        %724 = vmatpush2.msra.mxu0 0.0
        %725 = vmatprep.subr.mxu0 0.0
        %726 = vmatpush2.msra.mxu0 0.0
        %727 = vmatprep.subr.mxu0 0.0
        %728 = vmatpush2.msra.mxu0 0.0
        %729 = vmatprep.subr.mxu0 0.0
        %730 = vmatpush2.msra.mxu0 0.0
        %731 = vmatprep.subr.mxu0 0.0
        %732 = vmatpush2.msra.mxu0 0.0
        %733 = vmatprep.subr.mxu0 0.0
        %734 = vmatpush2.msra.mxu0 0.0
        %735 = vmatprep.subr.mxu0 0.0
        %736 = vmatpush2.msra.mxu0 0.0
        %737 = vmatprep.subr.mxu0 0.0
        %738 = vmatpush2.msra.mxu0 0.0
        %739 = vmatprep.subr.mxu0 0.0
        %740 = vmatpush2.msra.mxu0 0.0
        %741 = vmatprep.subr.mxu0 0.0
        %742 = vmatpush2.msra.mxu0 0.0
        %743 = vmatprep.subr.mxu0 0.0
        %744 = vmatpush2.msra.mxu0 0.0
        %745 = vmatprep.subr.mxu0 0.0
        %746 = vmatpush2.msra.mxu0 0.0
        %747 = vmatprep.subr.mxu0 0.0
        %748 = vmatpush2.msra.mxu0 0.0
        %749 = vmatprep.subr.mxu0 0.0
        %750 = vmatpush2.msra.mxu0 0.0
        %751 = vmatprep.subr.mxu0 0.0
        %752 = vmatpush2.msra.mxu0 0.0
        %753 = vmatprep.subr.mxu0 0.0
        %754 = vmatpush2.msra.mxu0 0.0
        %755 = vmatprep.mubr.f32.mxu0 0.0
        %756 = vmatmul.mubr.f32.gmra.mxu0 %v689
        %v757 = vpop.f32.mrf.mxu0
        %v758 = vadd.f32 %v685, %v757
        %v759 = vpop.f32.mrf.mxu0
        %v760 = vadd.f32 %v685, %v759
        %761 = vdwg.mxu0
        %v762 = vmax.f32 %v758, 0.0
        %v763 = vmax.f32 %v760, 0.0
        %766 = vrot.lane.b32.xlu0 %v762, 127
        %v767 = vpop.permute.xlu0 %766
        %768 = vrot.lane.b32.xlu0 %v763, 127
        %v769 = vpop.permute.xlu0 %768
        %v770 = vsel %vm405, %v767, %v769
        %v773 = vsel %vm405, %v769, 0.0
        %v774 = vmax.f32 %v762, %v770
        %v775 = vmax.f32 %v763, %v773
        %778 = vrot.lane.b32.xlu0 %v774, 112
        %v779 = vpop.permute.xlu0 %778
        %780 = vrot.lane.b32.xlu0 %v775, 112
        %v781 = vpop.permute.xlu0 %780
        %v782 = vsel %vm427, %v779, %v781
        %v785 = vsel %vm427, %v781, 0.0
        %v786 = vmax.f32 %v774, %v782
        %v787 = vmax.f32 %v775, %v785
        %v788 = vld [vmem:[#allocation2] sm:$0xff]
        %v789 = vld [vmem:[#allocation2 + $0x8] sm:$0xff]
        %v790 = vld [vmem:[#allocation2 + $0x10] sm:$0xff]
        %v791 = vld [vmem:[#allocation2 + $0x18] sm:$0xff]
        %v792 = vld [vmem:[#allocation2 + $0x20] sm:$0xff]
        %v793 = vld [vmem:[#allocation2 + $0x28] sm:$0xff]
        %v794 = vld [vmem:[#allocation2 + $0x30] sm:$0xff]
        %v795 = vld [vmem:[#allocation2 + $0x38] sm:$0xff]
        %v796 = vld [vmem:[#allocation2 + $0x40] sm:$0xff]
        %v797 = vld [vmem:[#allocation2 + $0x48] sm:$0xff]
        %v798 = vld [vmem:[#allocation2 + $0x50] sm:$0xff]
        %v799 = vld [vmem:[#allocation2 + $0x58] sm:$0xff]
        %v800 = vld [vmem:[#allocation2 + $0x60] sm:$0xff]
        %v801 = vld [vmem:[#allocation2 + $0x68] sm:$0xff]
        %v802 = vld [vmem:[#allocation2 + $0x70] sm:$0xff]
        %v803 = vld [vmem:[#allocation2 + $0x78] sm:$0xff]
        %v804 = vld [vmem:[#allocation2 + $0x80] sm:$0xff]
        %v805 = vld [vmem:[#allocation2 + $0x88] sm:$0xff]
        %v806 = vld [vmem:[#allocation2 + $0x90] sm:$0xff]
        %v807 = vld [vmem:[#allocation2 + $0x98] sm:$0xff]
        %v808 = vld [vmem:[#allocation2 + $0xa0] sm:$0xff]
        %v809 = vld [vmem:[#allocation2 + $0xa8] sm:$0xff]
        %v810 = vld [vmem:[#allocation2 + $0xb0] sm:$0xff]
        %v811 = vld [vmem:[#allocation2 + $0xb8] sm:$0xff]
        %v812 = vld [vmem:[#allocation2 + $0xc0] sm:$0xff]
        %v813 = vld [vmem:[#allocation2 + $0xc8] sm:$0xff]
        %v814 = vld [vmem:[#allocation2 + $0xd0] sm:$0xff]
        %v815 = vld [vmem:[#allocation2 + $0xd8] sm:$0xff]
        %v816 = vld [vmem:[#allocation2 + $0xe0] sm:$0xff]
        %v817 = vld [vmem:[#allocation2 + $0xe8] sm:$0xff]
        %v818 = vld [vmem:[#allocation2 + $0xf0] sm:$0xff]
        %v819 = vld [vmem:[#allocation2 + $0xf8] sm:$0xff]
        %820 = vmatprep.subr.mxu0 0.0
        %821 = vmatpush1.msra.mxu0 %v803
        %822 = vmatprep.subr.mxu0 0.0
        %823 = vmatpush1.msra.mxu0 %v802
        %824 = vmatprep.subr.mxu0 0.0
        %825 = vmatpush1.msra.mxu0 %v801
        %826 = vmatprep.subr.mxu0 0.0
        %827 = vmatpush1.msra.mxu0 %v800
        %828 = vmatprep.subr.mxu0 0.0
        %829 = vmatpush1.msra.mxu0 %v799
        %830 = vmatprep.subr.mxu0 0.0
        %831 = vmatpush1.msra.mxu0 %v798
        %832 = vmatprep.subr.mxu0 0.0
        %833 = vmatpush1.msra.mxu0 %v797
        %834 = vmatprep.subr.mxu0 0.0
        %835 = vmatpush1.msra.mxu0 %v796
        %836 = vmatprep.subr.mxu0 0.0
        %837 = vmatpush1.msra.mxu0 %v795
        %838 = vmatprep.subr.mxu0 0.0
        %839 = vmatpush1.msra.mxu0 %v794
        %840 = vmatprep.subr.mxu0 0.0
        %841 = vmatpush1.msra.mxu0 %v793
        %842 = vmatprep.subr.mxu0 0.0
        %843 = vmatpush1.msra.mxu0 %v792
        %844 = vmatprep.subr.mxu0 0.0
        %845 = vmatpush1.msra.mxu0 %v791
        %846 = vmatprep.subr.mxu0 0.0
        %847 = vmatpush1.msra.mxu0 %v790
        %848 = vmatprep.subr.mxu0 0.0
        %849 = vmatpush1.msra.mxu0 %v789
        %850 = vmatprep.subr.mxu0 0.0
        %851 = vmatpush1.msra.mxu0 %v788
        %852 = vmatprep.subr.mxu0 0.0
        %853 = vmatpush2.msra.mxu0 %v819
        %854 = vmatprep.subr.mxu0 0.0
        %855 = vmatpush2.msra.mxu0 %v818
        %856 = vmatprep.subr.mxu0 0.0
        %857 = vmatpush2.msra.mxu0 %v817
        %858 = vmatprep.subr.mxu0 0.0
        %859 = vmatpush2.msra.mxu0 %v816
        %860 = vmatprep.subr.mxu0 0.0
        %861 = vmatpush2.msra.mxu0 %v815
        %862 = vmatprep.subr.mxu0 0.0
        %863 = vmatpush2.msra.mxu0 %v814
        %864 = vmatprep.subr.mxu0 0.0
        %865 = vmatpush2.msra.mxu0 %v813
        %866 = vmatprep.subr.mxu0 0.0
        %867 = vmatpush2.msra.mxu0 %v812
        %868 = vmatprep.subr.mxu0 0.0
        %869 = vmatpush2.msra.mxu0 %v811
        %870 = vmatprep.subr.mxu0 0.0
        %871 = vmatpush2.msra.mxu0 %v810
        %872 = vmatprep.subr.mxu0 0.0
        %873 = vmatpush2.msra.mxu0 %v809
        %874 = vmatprep.subr.mxu0 0.0
        %875 = vmatpush2.msra.mxu0 %v808
        %876 = vmatprep.subr.mxu0 0.0
        %877 = vmatpush2.msra.mxu0 %v807
        %878 = vmatprep.subr.mxu0 0.0
        %879 = vmatpush2.msra.mxu0 %v806
        %880 = vmatprep.subr.mxu0 0.0
        %881 = vmatpush2.msra.mxu0 %v805
        %882 = vmatprep.subr.mxu0 0.0
        %883 = vmatpush2.msra.mxu0 %v804
        %884 = vmatprep.mubr.f32.mxu0 %v787
        %885 = vmatmul.mubr.f32.gmra.mxu0 %v786
        %v886 = vpop.f32.mrf.mxu0
        %v887 = vadd.f32 0.0, %v886
        %v888 = vpop.f32.mrf.mxu0
        %889 = vdwg.mxu0
        %vm890 = vcmask 523264
        %891 = vst.msk [vmem:[%s318] sm:$0xff] %vm890, %v887
        %p892 = scmp.lt.s32.totalorder %s20, 1
        %s893 = scalar_select %p892, %s20, 1
        %s894 = smul.addr %s893, 8
        %s895 = scalar_lea.vmem %s8, %s894
        // Predicated region
        $region57: #{_forward_impl.2} parent=51 // pred_check
          %p896 = pneg %p211
        $region58: #{_forward_impl.2} parent=51 // pred_check_branch
          %898 = sbr.rel (%p896) target = $region60
        $region59: #{_forward_impl.2} parent=51 // pred_region
          _
        $region60: #{_forward_impl.2} parent=51 // pred_fallthru
          _
      $region52: #{_forward_impl.2} parent=5 // pred_fallthru
        _
      %p899 = scmp.le.s32.totalorder 2, %s15
      // Predicated region
      $region61: #{_forward_impl.2} parent=5 // pred_check
        %p900 = pneg %p899
      $region62: #{_forward_impl.2} parent=5 // pred_check_branch
        %902 = sbr.rel (%p900) target = $region64
      $region63: #{_forward_impl.2} parent=5 // pred_region
        %s903 = ssub.s32 %s15, 2
        // Predicated region
        $region65: #{_forward_impl.2} parent=63 // pred_check
          %p904 = pneg %p217
        $region66: #{_forward_impl.2} parent=63 // pred_check_branch
          %906 = sbr.rel (%p904) target = $region68
        $region67: #{_forward_impl.2} parent=63 // pred_region
          %p907 = scmp.lt.s32.totalorder %s21, 1
          %s908 = scalar_select %p907, %s21, 1
          %s909 = smul.addr %s908, 8
          %s910 = scalar_lea.vmem %s8, %s909
        $region68: #{_forward_impl.2} parent=63 // pred_fallthru
          _
      $region64: #{_forward_impl.2} parent=5 // pred_fallthru
        _
    $region6: #{_forward_impl.2} parent=1 // loop_footer
      %s19 = sadd.s32 1, %s15
    $region7: #{_forward_impl.2} parent=1 // loop_footer_branch
      %14 = sbr.rel target = $region3
    $region8: #{_forward_impl.2} parent=1 // loop_exit
      _
    %911 = vsyncpa [#allocation3], 1
    %s912 = scalar_lea.sflag [#allocation3], 1
    %913 = vsyncpa %s912, 1

</llo_original>
